<compile_context>
chip_gen: v7x
topology: tpu7x:2x2x1
jax: 0.10.0
libtpu: 0.0.40
codegen_flags: <defaults>
</compile_context>

<pallas_src>
import functools

import jax
import jax.numpy as jnp
import numpy as np
from jax import lax
from jax.experimental import pallas as pl
from jax.experimental.pallas import tpu as pltpu

KSIZE = 3  # get_conv2d(kernel_size=3) -> 3x3, stride 1, padding 1 ("same"), bias


def lstm2d_kernel(w_ref, b_ref, xh_ref, c_ref, h_out_ref, c_out_ref, *, wp):
    # w_ref:     (9, Hid, Ctot)  bf16  fused [conv_in | conv_hidden] weight per tap
    # b_ref:     (Hid, 1)        f32   b_in + b_h
    # xh_ref:    (1, Ctot, Wg)   bf16  guarded zero-padded channel-major flat [x ; hidden]
    # c_ref:     (1, Hid, Mimg)  f32   previous cell state, padded-flat layout
    # h_out_ref: (1, Hid, Mimg)  bf16
    # c_out_ref: (1, Hid, Mimg)  f32
    hid = c_ref.shape[1]
    m = c_ref.shape[2]

    # In-kernel im2col: tap (kh, kw) is the lane-window starting at kh*Wp + kw
    # of the guarded flat input (guard width = Wp + 1, so every window is an
    # in-bounds contiguous slice).  Border output columns are garbage and are
    # discarded by the wrapper; interior columns get exact "same" conv.
    acc = jnp.zeros((hid, m), jnp.float32)
    for t in range(KSIZE * KSIZE):               # static unroll: 9 taps
        kh, kw = t // KSIZE, t % KSIZE
        start = kh * wp + kw
        win = xh_ref[0, :, pl.ds(start, m)]      # (Ctot, Mimg) bf16, lane-dense
        acc += jnp.dot(w_ref[t], win, preferred_element_type=jnp.float32)

    x_h = acc + b_ref[...]                       # lane-broadcast bias

    gate = jax.nn.sigmoid(x_h)                   # forget == input == output gate (shared)
    c_tilde = jnp.tanh(x_h)
    new_cell = gate * (c_ref[0] + c_tilde)       # gate*c + gate*c~
    new_hidden = gate * jnp.tanh(new_cell)

    h_out_ref[0] = new_hidden.astype(h_out_ref.dtype)   # bf16 writeback (half traffic)
    c_out_ref[0] = new_cell


def lstm2d_forward(x_nchw, hidden_nchw, cell_nchw, w_in, b_in, w_h, b_h):
    """x: (B, Cin, H, W); hidden/cell: (B, Hid, H, W).  Conv weights are HWIO."""
    x = x_nchw.astype(jnp.float32)
    h = hidden_nchw.astype(jnp.float32)
    c = cell_nchw.astype(jnp.float32)

    B, Cin, H, W = x.shape
    Hid = h.shape[1]
    Hp, Wp = H + 2, W + 2
    Mimg = Hp * Wp
    G = Wp + 1                       # guard so every tap window is an in-bounds slice
    Wg = Mimg + 2 * G
    Ctot = Cin + Hid

    def pad_flat(t):                 # (B, C, H, W) -> (B, C, Hp*Wp), zero spatial border
        tp = jnp.pad(t, ((0, 0), (0, 0), (1, 1), (1, 1)))
        return tp.reshape(t.shape[0], t.shape[1], Mimg)

    # Guarded channel-major matmul operand [x ; hidden] in bf16.
    # NOTE: hidden is quantized to bf16 here (matmul operand precision); cell stays f32.
    xh = jnp.concatenate([pad_flat(x), pad_flat(h)], axis=1)           # (B, Ctot, Mimg)
    xh = jnp.pad(xh, ((0, 0), (0, 0), (G, G))).astype(jnp.bfloat16)    # (B, Ctot, Wg)

    cell_pf = pad_flat(c)                                              # (B, Hid, Mimg) f32

    # Fused per-tap weights (9, Hid, Ctot); tap index = kh*3 + kw, cols = [x ch ; hidden ch].
    w_in_t = jnp.transpose(w_in.astype(jnp.float32), (0, 1, 3, 2)).reshape(
        KSIZE * KSIZE, Hid, Cin)
    w_h_t = jnp.transpose(w_h.astype(jnp.float32), (0, 1, 3, 2)).reshape(
        KSIZE * KSIZE, Hid, Hid)
    w_fused = jnp.concatenate([w_in_t, w_h_t], axis=2).astype(jnp.bfloat16)

    bias = (b_in.astype(jnp.float32) + b_h.astype(jnp.float32)).reshape(Hid, 1)

    grid = (B,)                      # one image per step; "parallel" -> megacore on v7x
    in_specs = [
        pl.BlockSpec((KSIZE * KSIZE, Hid, Ctot), lambda b: (0, 0, 0)),  # weights (resident)
        pl.BlockSpec((Hid, 1), lambda b: (0, 0)),                       # bias (resident)
        pl.BlockSpec((1, Ctot, Wg), lambda b: (b, 0, 0)),               # one image [x ; h]
        pl.BlockSpec((1, Hid, Mimg), lambda b: (b, 0, 0)),              # one image cell
    ]
    out_specs = (
        pl.BlockSpec((1, Hid, Mimg), lambda b: (b, 0, 0)),
        pl.BlockSpec((1, Hid, Mimg), lambda b: (b, 0, 0)),
    )
    out_shape = (
        jax.ShapeDtypeStruct((B, Hid, Mimg), jnp.bfloat16),   # hidden (bf16 writeback)
        jax.ShapeDtypeStruct((B, Hid, Mimg), jnp.float32),    # cell
    )

    h_pf, c_pf = pl.pallas_call(
        functools.partial(lstm2d_kernel, wp=Wp),
        out_shape=out_shape,
        grid_spec=pltpu.PrefetchScalarGridSpec(
            num_scalar_prefetch=0,
            grid=grid,
            in_specs=in_specs,
            out_specs=out_specs,
        ),
        compiler_params=pltpu.CompilerParams(
            dimension_semantics=("parallel",)),
    )(w_fused, bias, xh, cell_pf)

    # Padded-flat (B, Hid, Hp*Wp) -> NCHW (B, Hid, H, W).  In a recurrent rollout
    # keep the padded-flat channel-major state between steps and only convert at
    # sequence boundaries (avoids per-step transpose round trips through HBM).
    def unpad(t):
        return t.reshape(B, Hid, Hp, Wp)[:, :, 1:-1, 1:-1]

    return unpad(h_pf.astype(jnp.float32)), unpad(c_pf)


lstm2d_forward = jax.jit(lstm2d_forward)


def lstm2d_reference(x_nchw, hidden_nchw, cell_nchw, w_in, b_in, w_h, b_h):
    """Pure-JAX reference using lax.conv (for correctness check)."""
    x = jnp.transpose(x_nchw, (0, 2, 3, 1)).astype(jnp.float32)
    h = jnp.transpose(hidden_nchw, (0, 2, 3, 1)).astype(jnp.float32)
    c = jnp.transpose(cell_nchw, (0, 2, 3, 1)).astype(jnp.float32)
    dn = lax.conv_dimension_numbers(x.shape, w_in.shape, ("NHWC", "HWIO", "NHWC"))
    cx = lax.conv_general_dilated(x, w_in.astype(jnp.float32), (1, 1), "SAME",
                                  dimension_numbers=dn,
                                  precision=lax.Precision.HIGHEST) + b_in
    dn2 = lax.conv_dimension_numbers(h.shape, w_h.shape, ("NHWC", "HWIO", "NHWC"))
    ch = lax.conv_general_dilated(h, w_h.astype(jnp.float32), (1, 1), "SAME",
                                  dimension_numbers=dn2,
                                  precision=lax.Precision.HIGHEST) + b_h
    x_h = cx + ch
    g = jax.nn.sigmoid(x_h)
    ct = jnp.tanh(x_h)
    new_c = g * c + g * ct
    new_h = g * jnp.tanh(new_c)
    return (jnp.transpose(new_h, (0, 3, 1, 2)), jnp.transpose(new_c, (0, 3, 1, 2)))


if __name__ == "__main__":
    B, Cin, Hs, Ws = 2, 4, 16, 16
    Hid = 32

    key = jax.random.PRNGKey(0)
    k = jax.random.split(key, 7)

    # Pre-round matmul operands to bf16-representable values so the bf16 kernel
    # and the f32 reference see identical effective inputs.
    def bf16_round(t):
        return t.astype(jnp.bfloat16).astype(jnp.float32)

    x = bf16_round(jax.random.normal(k[0], (B, Cin, Hs, Ws), jnp.float32))
    hidden = bf16_round(jax.random.normal(k[1], (B, Hid, Hs, Ws), jnp.float32))
    cell = jax.random.normal(k[2], (B, Hid, Hs, Ws), jnp.float32)

    # Deterministic parameter init (HWIO layout), ~ kaiming-ish scale.
    w_in = bf16_round(jax.random.normal(k[3], (KSIZE, KSIZE, Cin, Hid), jnp.float32) * 0.1)
    b_in = jax.random.normal(k[4], (Hid,), jnp.float32) * 0.01
    w_h = bf16_round(jax.random.normal(k[5], (KSIZE, KSIZE, Hid, Hid), jnp.float32) * 0.1)
    b_h = jax.random.normal(k[6], (Hid,), jnp.float32) * 0.01

    new_h, new_c = lstm2d_forward(x, hidden, cell, w_in, b_in, w_h, b_h)
    jax.block_until_ready((new_h, new_c))

    ref_h, ref_c = lstm2d_reference(x, hidden, cell, w_in, b_in, w_h, b_h)
    # Cell is computed end-to-end in f32 -> tight tolerance.
    np.testing.assert_allclose(np.asarray(new_c), np.asarray(ref_c), rtol=1e-3, atol=1e-3)
    # Hidden is emitted in bf16 by the kernel (consumed as bf16 next step) -> bf16 tolerance.
    np.testing.assert_allclose(np.asarray(new_h), np.asarray(ref_h), rtol=1e-2, atol=4e-3)

    print("KERNEL_OK")
</pallas_src>

<mosaic_0001>
module attributes {stable_mosaic.version = 11 : i64} {
  func.func @lstm2d_kernel(%arg0: i32, %arg1: memref<9x32x36xbf16, #tpu.memory_space<vmem>>, %arg2: memref<32x1xf32, #tpu.memory_space<vmem>>, %arg3: memref<1x36x362xbf16, #tpu.memory_space<vmem>>, %arg4: memref<1x32x324xf32, #tpu.memory_space<vmem>>, %arg5: memref<1x32x324xbf16, #tpu.memory_space<vmem>>, %arg6: memref<1x32x324xf32, #tpu.memory_space<vmem>>) attributes {dimension_semantics = [#tpu.dimension_semantics<parallel>], iteration_bounds = array<i64: 2>, scalar_prefetch = 0 : i64, scratch_operands = 0 : i64, tpu.core_type = #tpu.core_type<tc>, window_params = [{pipeline_mode = #tpu.pipeline_mode<synchronous>, transform_indices = @transform_0, window_bounds = array<i64: 9, 32, 36>}, {pipeline_mode = #tpu.pipeline_mode<synchronous>, transform_indices = @transform_1, window_bounds = array<i64: 32, 1>}, {transform_indices = @transform_2, window_bounds = array<i64: 1, 36, 362>}, {transform_indices = @transform_3, window_bounds = array<i64: 1, 32, 324>}, {transform_indices = @transform_4, window_bounds = array<i64: 1, 32, 324>}, {transform_indices = @transform_5, window_bounds = array<i64: 1, 32, 324>}]} {
    %cst = arith.constant 0.000000e+00 : f32
    %0 = vector.broadcast %cst : f32 to vector<32x324xf32>
    %c0 = arith.constant 0 : index
    %c0_0 = arith.constant 0 : index
    %c0_1 = arith.constant 0 : index
    %1 = vector.load %arg3[%c0, %c0_0, %c0_1] : memref<1x36x362xbf16, #tpu.memory_space<vmem>>, vector<1x36x324xbf16>
    %2 = vector.shape_cast %1 : vector<1x36x324xbf16> to vector<36x324xbf16>
    %c0_2 = arith.constant 0 : index
    %c0_3 = arith.constant 0 : index
    %c0_4 = arith.constant 0 : index
    %3 = vector.load %arg1[%c0_2, %c0_3, %c0_4] : memref<9x32x36xbf16, #tpu.memory_space<vmem>>, vector<1x32x36xbf16>
    %4 = vector.shape_cast %3 : vector<1x32x36xbf16> to vector<32x36xbf16>
    %cst_5 = arith.constant dense<0.000000e+00> : vector<32x324xf32>
    %5 = tpu.matmul %4, %2, %cst_5 {dimension_numbers = #tpu.dot_dimension_numbers<[1], [0], [0], [1], [0, 0, 1, 1], [], []>} : vector<32x36xbf16>, vector<36x324xbf16>, vector<32x324xf32> -> vector<32x324xf32>
    %6 = arith.addf %0, %5 : vector<32x324xf32>
    %c0_6 = arith.constant 0 : index
    %c0_7 = arith.constant 0 : index
    %c1 = arith.constant 1 : index
    %7 = vector.load %arg3[%c0_6, %c0_7, %c1] : memref<1x36x362xbf16, #tpu.memory_space<vmem>>, vector<1x36x324xbf16>
    %8 = vector.shape_cast %7 : vector<1x36x324xbf16> to vector<36x324xbf16>
    %c1_8 = arith.constant 1 : index
    %c0_9 = arith.constant 0 : index
    %c0_10 = arith.constant 0 : index
    %9 = vector.load %arg1[%c1_8, %c0_9, %c0_10] : memref<9x32x36xbf16, #tpu.memory_space<vmem>>, vector<1x32x36xbf16>
    %10 = vector.shape_cast %9 : vector<1x32x36xbf16> to vector<32x36xbf16>
    %cst_11 = arith.constant dense<0.000000e+00> : vector<32x324xf32>
    %11 = tpu.matmul %10, %8, %cst_11 {dimension_numbers = #tpu.dot_dimension_numbers<[1], [0], [0], [1], [0, 0, 1, 1], [], []>} : vector<32x36xbf16>, vector<36x324xbf16>, vector<32x324xf32> -> vector<32x324xf32>
    %12 = arith.addf %6, %11 : vector<32x324xf32>
    %c0_12 = arith.constant 0 : index
    %c0_13 = arith.constant 0 : index
    %c2 = arith.constant 2 : index
    %13 = vector.load %arg3[%c0_12, %c0_13, %c2] : memref<1x36x362xbf16, #tpu.memory_space<vmem>>, vector<1x36x324xbf16>
    %14 = vector.shape_cast %13 : vector<1x36x324xbf16> to vector<36x324xbf16>
    %c2_14 = arith.constant 2 : index
    %c0_15 = arith.constant 0 : index
    %c0_16 = arith.constant 0 : index
    %15 = vector.load %arg1[%c2_14, %c0_15, %c0_16] : memref<9x32x36xbf16, #tpu.memory_space<vmem>>, vector<1x32x36xbf16>
    %16 = vector.shape_cast %15 : vector<1x32x36xbf16> to vector<32x36xbf16>
    %cst_17 = arith.constant dense<0.000000e+00> : vector<32x324xf32>
    %17 = tpu.matmul %16, %14, %cst_17 {dimension_numbers = #tpu.dot_dimension_numbers<[1], [0], [0], [1], [0, 0, 1, 1], [], []>} : vector<32x36xbf16>, vector<36x324xbf16>, vector<32x324xf32> -> vector<32x324xf32>
    %18 = arith.addf %12, %17 : vector<32x324xf32>
    %c0_18 = arith.constant 0 : index
    %c0_19 = arith.constant 0 : index
    %c18 = arith.constant 18 : index
    %19 = vector.load %arg3[%c0_18, %c0_19, %c18] : memref<1x36x362xbf16, #tpu.memory_space<vmem>>, vector<1x36x324xbf16>
    %20 = vector.shape_cast %19 : vector<1x36x324xbf16> to vector<36x324xbf16>
    %c3 = arith.constant 3 : index
    %c0_20 = arith.constant 0 : index
    %c0_21 = arith.constant 0 : index
    %21 = vector.load %arg1[%c3, %c0_20, %c0_21] : memref<9x32x36xbf16, #tpu.memory_space<vmem>>, vector<1x32x36xbf16>
    %22 = vector.shape_cast %21 : vector<1x32x36xbf16> to vector<32x36xbf16>
    %cst_22 = arith.constant dense<0.000000e+00> : vector<32x324xf32>
    %23 = tpu.matmul %22, %20, %cst_22 {dimension_numbers = #tpu.dot_dimension_numbers<[1], [0], [0], [1], [0, 0, 1, 1], [], []>} : vector<32x36xbf16>, vector<36x324xbf16>, vector<32x324xf32> -> vector<32x324xf32>
    %24 = arith.addf %18, %23 : vector<32x324xf32>
    %c0_23 = arith.constant 0 : index
    %c0_24 = arith.constant 0 : index
    %c19 = arith.constant 19 : index
    %25 = vector.load %arg3[%c0_23, %c0_24, %c19] : memref<1x36x362xbf16, #tpu.memory_space<vmem>>, vector<1x36x324xbf16>
    %26 = vector.shape_cast %25 : vector<1x36x324xbf16> to vector<36x324xbf16>
    %c4 = arith.constant 4 : index
    %c0_25 = arith.constant 0 : index
    %c0_26 = arith.constant 0 : index
    %27 = vector.load %arg1[%c4, %c0_25, %c0_26] : memref<9x32x36xbf16, #tpu.memory_space<vmem>>, vector<1x32x36xbf16>
    %28 = vector.shape_cast %27 : vector<1x32x36xbf16> to vector<32x36xbf16>
    %cst_27 = arith.constant dense<0.000000e+00> : vector<32x324xf32>
    %29 = tpu.matmul %28, %26, %cst_27 {dimension_numbers = #tpu.dot_dimension_numbers<[1], [0], [0], [1], [0, 0, 1, 1], [], []>} : vector<32x36xbf16>, vector<36x324xbf16>, vector<32x324xf32> -> vector<32x324xf32>
    %30 = arith.addf %24, %29 : vector<32x324xf32>
    %c0_28 = arith.constant 0 : index
    %c0_29 = arith.constant 0 : index
    %c20 = arith.constant 20 : index
    %31 = vector.load %arg3[%c0_28, %c0_29, %c20] : memref<1x36x362xbf16, #tpu.memory_space<vmem>>, vector<1x36x324xbf16>
    %32 = vector.shape_cast %31 : vector<1x36x324xbf16> to vector<36x324xbf16>
    %c5 = arith.constant 5 : index
    %c0_30 = arith.constant 0 : index
    %c0_31 = arith.constant 0 : index
    %33 = vector.load %arg1[%c5, %c0_30, %c0_31] : memref<9x32x36xbf16, #tpu.memory_space<vmem>>, vector<1x32x36xbf16>
    %34 = vector.shape_cast %33 : vector<1x32x36xbf16> to vector<32x36xbf16>
    %cst_32 = arith.constant dense<0.000000e+00> : vector<32x324xf32>
    %35 = tpu.matmul %34, %32, %cst_32 {dimension_numbers = #tpu.dot_dimension_numbers<[1], [0], [0], [1], [0, 0, 1, 1], [], []>} : vector<32x36xbf16>, vector<36x324xbf16>, vector<32x324xf32> -> vector<32x324xf32>
    %36 = arith.addf %30, %35 : vector<32x324xf32>
    %c0_33 = arith.constant 0 : index
    %c0_34 = arith.constant 0 : index
    %c36 = arith.constant 36 : index
    %37 = vector.load %arg3[%c0_33, %c0_34, %c36] : memref<1x36x362xbf16, #tpu.memory_space<vmem>>, vector<1x36x324xbf16>
    %38 = vector.shape_cast %37 : vector<1x36x324xbf16> to vector<36x324xbf16>
    %c6 = arith.constant 6 : index
    %c0_35 = arith.constant 0 : index
    %c0_36 = arith.constant 0 : index
    %39 = vector.load %arg1[%c6, %c0_35, %c0_36] : memref<9x32x36xbf16, #tpu.memory_space<vmem>>, vector<1x32x36xbf16>
    %40 = vector.shape_cast %39 : vector<1x32x36xbf16> to vector<32x36xbf16>
    %cst_37 = arith.constant dense<0.000000e+00> : vector<32x324xf32>
    %41 = tpu.matmul %40, %38, %cst_37 {dimension_numbers = #tpu.dot_dimension_numbers<[1], [0], [0], [1], [0, 0, 1, 1], [], []>} : vector<32x36xbf16>, vector<36x324xbf16>, vector<32x324xf32> -> vector<32x324xf32>
    %42 = arith.addf %36, %41 : vector<32x324xf32>
    %c0_38 = arith.constant 0 : index
    %c0_39 = arith.constant 0 : index
    %c37 = arith.constant 37 : index
    %43 = vector.load %arg3[%c0_38, %c0_39, %c37] : memref<1x36x362xbf16, #tpu.memory_space<vmem>>, vector<1x36x324xbf16>
    %44 = vector.shape_cast %43 : vector<1x36x324xbf16> to vector<36x324xbf16>
    %c7 = arith.constant 7 : index
    %c0_40 = arith.constant 0 : index
    %c0_41 = arith.constant 0 : index
    %45 = vector.load %arg1[%c7, %c0_40, %c0_41] : memref<9x32x36xbf16, #tpu.memory_space<vmem>>, vector<1x32x36xbf16>
    %46 = vector.shape_cast %45 : vector<1x32x36xbf16> to vector<32x36xbf16>
    %cst_42 = arith.constant dense<0.000000e+00> : vector<32x324xf32>
    %47 = tpu.matmul %46, %44, %cst_42 {dimension_numbers = #tpu.dot_dimension_numbers<[1], [0], [0], [1], [0, 0, 1, 1], [], []>} : vector<32x36xbf16>, vector<36x324xbf16>, vector<32x324xf32> -> vector<32x324xf32>
    %48 = arith.addf %42, %47 : vector<32x324xf32>
    %c0_43 = arith.constant 0 : index
    %c0_44 = arith.constant 0 : index
    %c38 = arith.constant 38 : index
    %49 = vector.load %arg3[%c0_43, %c0_44, %c38] : memref<1x36x362xbf16, #tpu.memory_space<vmem>>, vector<1x36x324xbf16>
    %50 = vector.shape_cast %49 : vector<1x36x324xbf16> to vector<36x324xbf16>
    %c8 = arith.constant 8 : index
    %c0_45 = arith.constant 0 : index
    %c0_46 = arith.constant 0 : index
    %51 = vector.load %arg1[%c8, %c0_45, %c0_46] : memref<9x32x36xbf16, #tpu.memory_space<vmem>>, vector<1x32x36xbf16>
    %52 = vector.shape_cast %51 : vector<1x32x36xbf16> to vector<32x36xbf16>
    %cst_47 = arith.constant dense<0.000000e+00> : vector<32x324xf32>
    %53 = tpu.matmul %52, %50, %cst_47 {dimension_numbers = #tpu.dot_dimension_numbers<[1], [0], [0], [1], [0, 0, 1, 1], [], []>} : vector<32x36xbf16>, vector<36x324xbf16>, vector<32x324xf32> -> vector<32x324xf32>
    %54 = arith.addf %48, %53 : vector<32x324xf32>
    %c0_48 = arith.constant 0 : index
    %c0_49 = arith.constant 0 : index
    %55 = vector.load %arg2[%c0_48, %c0_49] : memref<32x1xf32, #tpu.memory_space<vmem>>, vector<32x1xf32>
    %56 = vector.broadcast %55 : vector<32x1xf32> to vector<32x324xf32>
    %57 = arith.addf %54, %56 : vector<32x324xf32>
    %58 = arith.negf %57 : vector<32x324xf32>
    %59 = math.exp %58 : vector<32x324xf32>
    %cst_50 = arith.constant 1.000000e+00 : f32
    %60 = vector.broadcast %cst_50 : f32 to vector<32x324xf32>
    %61 = arith.addf %60, %59 : vector<32x324xf32>
    %62 = arith.divf %60, %61 : vector<32x324xf32>
    %63 = math.tanh %57 : vector<32x324xf32>
    %c0_51 = arith.constant 0 : index
    %c0_52 = arith.constant 0 : index
    %c0_53 = arith.constant 0 : index
    %64 = vector.load %arg4[%c0_51, %c0_52, %c0_53] : memref<1x32x324xf32, #tpu.memory_space<vmem>>, vector<1x32x324xf32>
    %65 = vector.shape_cast %64 : vector<1x32x324xf32> to vector<32x324xf32>
    %66 = arith.addf %65, %63 : vector<32x324xf32>
    %67 = arith.mulf %62, %66 : vector<32x324xf32>
    %68 = math.tanh %67 : vector<32x324xf32>
    %69 = arith.mulf %62, %68 : vector<32x324xf32>
    %70 = arith.truncf %69 : vector<32x324xf32> to vector<32x324xbf16>
    %c0_54 = arith.constant 0 : index
    %c0_55 = arith.constant 0 : index
    %c0_56 = arith.constant 0 : index
    %71 = vector.load %arg5[%c0_54, %c0_55, %c0_56] : memref<1x32x324xbf16, #tpu.memory_space<vmem>>, vector<1x32x324xbf16>
    %72 = vector.shape_cast %71 : vector<1x32x324xbf16> to vector<32x324xbf16>
    %73 = vector.shape_cast %70 : vector<32x324xbf16> to vector<1x32x324xbf16>
    tpu.vector_store %arg5[%c0_54, %c0_55, %c0_56], %73 {strides = array<i32>} : memref<1x32x324xbf16, #tpu.memory_space<vmem>>, vector<1x32x324xbf16>,
    %c0_57 = arith.constant 0 : index
    %c0_58 = arith.constant 0 : index
    %c0_59 = arith.constant 0 : index
    %74 = vector.load %arg6[%c0_57, %c0_58, %c0_59] : memref<1x32x324xf32, #tpu.memory_space<vmem>>, vector<1x32x324xf32>
    %75 = vector.shape_cast %74 : vector<1x32x324xf32> to vector<32x324xf32>
    %76 = vector.shape_cast %67 : vector<32x324xf32> to vector<1x32x324xf32>
    tpu.vector_store %arg6[%c0_57, %c0_58, %c0_59], %76 {strides = array<i32>} : memref<1x32x324xf32, #tpu.memory_space<vmem>>, vector<1x32x324xf32>,
    return
  }
  func.func @transform_0(%arg0: i32) -> (i32, i32, i32) {
    %c0_i32 = arith.constant 0 : i32
    %c0_i32_0 = arith.constant 0 : i32
    %c0_i32_1 = arith.constant 0 : i32
    %c0_i32_2 = arith.constant 0 : i32
    return %c0_i32, %c0_i32_0, %c0_i32_1 : i32, i32, i32
  }
  func.func @transform_1(%arg0: i32) -> (i32, i32) {
    %c0_i32 = arith.constant 0 : i32
    %c0_i32_0 = arith.constant 0 : i32
    %c0_i32_1 = arith.constant 0 : i32
    return %c0_i32, %c0_i32_0 : i32, i32
  }
  func.func @transform_2(%arg0: i32) -> (i32, i32, i32) {
    %c0_i32 = arith.constant 0 : i32
    %c0_i32_0 = arith.constant 0 : i32
    %c0_i32_1 = arith.constant 0 : i32
    return %arg0, %c0_i32, %c0_i32_0 : i32, i32, i32
  }
  func.func @transform_3(%arg0: i32) -> (i32, i32, i32) {
    %c0_i32 = arith.constant 0 : i32
    %c0_i32_0 = arith.constant 0 : i32
    %c0_i32_1 = arith.constant 0 : i32
    return %arg0, %c0_i32, %c0_i32_0 : i32, i32, i32
  }
  func.func @transform_4(%arg0: i32) -> (i32, i32, i32) {
    %c0_i32 = arith.constant 0 : i32
    %c0_i32_0 = arith.constant 0 : i32
    %c0_i32_1 = arith.constant 0 : i32
    return %arg0, %c0_i32, %c0_i32_0 : i32, i32, i32
  }
  func.func @transform_5(%arg0: i32) -> (i32, i32, i32) {
    %c0_i32 = arith.constant 0 : i32
    %c0_i32_0 = arith.constant 0 : i32
    %c0_i32_1 = arith.constant 0 : i32
    return %arg0, %c0_i32, %c0_i32_0 : i32, i32, i32
  }
}

</mosaic_0001>

<llo_original>
// kernel: lstm2d_forward.1
$region0: #{lstm2d_forward.1}
  #allocation0 [shape = 'u32[]', space=smem, size = 0x4, offset = 0x4, fixed_abs, tag = 'smem constant byte address 0x4 - core index']
  #allocation1 [shape = 'u32[144,128]{1,0:T(1,128)}', space=vmem, size = 0x12000, scoped, tag = 'internal scratch']
  %s0 = inlined_call_operand.vmem [shape: bf16[9,32,36], index: 0, kind: input, shape index: {}]
  %s1 = inlined_call_operand.vmem [shape: f32[32,1], index: 1, kind: input, shape index: {}]
  %s2 = inlined_call_operand.vmem [shape: bf16[2,36,362], index: 2, kind: input, shape index: {}]
  %s3 = inlined_call_operand.vmem [shape: f32[2,32,324], index: 3, kind: input, shape index: {}]
  %s4 = inlined_call_operand.vmem [shape: bf16[2,32,324], index: 4, kind: output, shape index: {0}]
  %s5 = inlined_call_operand.vmem [shape: f32[2,32,324], index: 5, kind: output, shape index: {1}]
  %6 = xla_tuple %s4, %s5
  %s7 = sld [smem:[#allocation0]]
  $region57: #{lstm2d_forward.1} parent=0
    _
  %s9 = ssub.s32 1, %s7
  %s10 = scalar_select 0, %s9, %s7
  loop: start=0, step=1, limit=4
  $region2: #{lstm2d_forward.1} parent=0 // loop_pre_header
    _
  $region3: #{lstm2d_forward.1} parent=0 // loop_header
    %s12 = sphi 0, %s16
    %p13 = scmp.ge.s32.totalorder %s12, 4
    %s20 = sphi 0, %s20
    %s22 = sphi 0, %s20
    %s23 = sphi 0, %s22
    %s37 = sphi 0, %s23
    %s41 = sphi 0, %s41
    %s43 = sphi 0, %s41
    %s44 = sphi 0, %s43
    %s58 = sphi 0, %s44
    %s64 = sphi 0, %s66
    %s67 = sphi 0, %s64
    %s68 = sphi 0, %s67
    %s84 = sphi 0, %s68
    %s90 = sphi 0, %s92
    %s93 = sphi 0, %s90
    %s94 = sphi 0, %s93
    %s110 = sphi 0, %s94
    %s116 = sphi 0, %s118
    %s119 = sphi 0, %s116
    %s120 = sphi 0, %s119
    %s136 = sphi 0, %s120
    %s142 = sphi 0, %s144
    %s145 = sphi 0, %s142
    %s146 = sphi 0, %s145
    %s162 = sphi 0, %s146
  $region4: #{lstm2d_forward.1} parent=0 // loop_header_branch
    %15 = sbr.rel (%p13) target = $region8
  $region5: #{lstm2d_forward.1} parent=0 // loop_body
    %s17 = ssub.s32 %s12, 1
    %s18 = ssub.s32 %s12, 2
    %s19 = sadd.s32 %s12, 1
    %s21 = sadd.s32 %s20, 1
    %p24 = scmp.eq.s32.totalorder %s12, 1
    %p25 = scmp.ne.s32.totalorder %s20, %s22
    %p26 = scmp.eq.s32.totalorder %s12, 0
    %p27 = por %p25, %p26
    %p28 = scmp.ne.s32.totalorder %s20, %s22
    %p29 = scmp.eq.s32.totalorder %s17, 1
    %p30 = por %p28, %p29
    %p31 = scmp.ne.s32.totalorder %s22, %s23
    %p32 = scmp.eq.s32.totalorder %s17, 0
    %p33 = por %p31, %p32
    %p34 = scmp.ne.s32.totalorder %s22, %s23
    %p35 = scmp.eq.s32.totalorder %s18, 1
    %p36 = por %p34, %p35
    %p38 = scmp.ne.s32.totalorder %s23, %s37
    %p39 = scmp.eq.s32.totalorder %s18, 0
    %p40 = por %p38, %p39
    %s42 = sadd.s32 %s41, 1
    %p45 = scmp.eq.s32.totalorder %s12, 1
    %p46 = scmp.ne.s32.totalorder %s41, %s43
    %p47 = scmp.eq.s32.totalorder %s12, 0
    %p48 = por %p46, %p47
    %p49 = scmp.ne.s32.totalorder %s41, %s43
    %p50 = scmp.eq.s32.totalorder %s17, 1
    %p51 = por %p49, %p50
    %p52 = scmp.ne.s32.totalorder %s43, %s44
    %p53 = scmp.eq.s32.totalorder %s17, 0
    %p54 = por %p52, %p53
    %p55 = scmp.ne.s32.totalorder %s43, %s44
    %p56 = scmp.eq.s32.totalorder %s18, 1
    %p57 = por %p55, %p56
    %p59 = scmp.ne.s32.totalorder %s44, %s58
    %p60 = scmp.eq.s32.totalorder %s18, 0
    %p61 = por %p59, %p60
    %s62 = ssub.s32 %s12, %s19
    %p63 = scmp.eq.s32.totalorder %s62, 0
    %s65 = sadd.s32 %s64, 1
    %s66 = scalar_select %p63, %s64, %s65
    %p69 = pneg %p63
    %p70 = scmp.eq.s32.totalorder %s12, 1
    %p71 = por %p69, %p70
    %p72 = scmp.ne.s32.totalorder %s64, %s67
    %p73 = scmp.eq.s32.totalorder %s12, 0
    %p74 = por %p72, %p73
    %p75 = scmp.ne.s32.totalorder %s64, %s67
    %p76 = scmp.eq.s32.totalorder %s17, 1
    %p77 = por %p75, %p76
    %p78 = scmp.ne.s32.totalorder %s67, %s68
    %p79 = scmp.eq.s32.totalorder %s17, 0
    %p80 = por %p78, %p79
    %p81 = scmp.ne.s32.totalorder %s67, %s68
    %p82 = scmp.eq.s32.totalorder %s18, 1
    %p83 = por %p81, %p82
    %p85 = scmp.ne.s32.totalorder %s68, %s84
    %p86 = scmp.eq.s32.totalorder %s18, 0
    %p87 = por %p85, %p86
    %s88 = ssub.s32 %s12, %s19
    %p89 = scmp.eq.s32.totalorder %s88, 0
    %s91 = sadd.s32 %s90, 1
    %s92 = scalar_select %p89, %s90, %s91
    %p95 = pneg %p89
    %p96 = scmp.eq.s32.totalorder %s12, 1
    %p97 = por %p95, %p96
    %p98 = scmp.ne.s32.totalorder %s90, %s93
    %p99 = scmp.eq.s32.totalorder %s12, 0
    %p100 = por %p98, %p99
    %p101 = scmp.ne.s32.totalorder %s90, %s93
    %p102 = scmp.eq.s32.totalorder %s17, 1
    %p103 = por %p101, %p102
    %p104 = scmp.ne.s32.totalorder %s93, %s94
    %p105 = scmp.eq.s32.totalorder %s17, 0
    %p106 = por %p104, %p105
    %p107 = scmp.ne.s32.totalorder %s93, %s94
    %p108 = scmp.eq.s32.totalorder %s18, 1
    %p109 = por %p107, %p108
    %p111 = scmp.ne.s32.totalorder %s94, %s110
    %p112 = scmp.eq.s32.totalorder %s18, 0
    %p113 = por %p111, %p112
    %s114 = ssub.s32 %s12, %s19
    %p115 = scmp.eq.s32.totalorder %s114, 0
    %s117 = sadd.s32 %s116, 1
    %s118 = scalar_select %p115, %s116, %s117
    %p121 = pneg %p115
    %p122 = scmp.eq.s32.totalorder %s12, 1
    %p123 = por %p121, %p122
    %p124 = scmp.ne.s32.totalorder %s116, %s119
    %p125 = scmp.eq.s32.totalorder %s12, 0
    %p126 = por %p124, %p125
    %p127 = scmp.ne.s32.totalorder %s116, %s119
    %p128 = scmp.eq.s32.totalorder %s17, 1
    %p129 = por %p127, %p128
    %p130 = scmp.ne.s32.totalorder %s119, %s120
    %p131 = scmp.eq.s32.totalorder %s17, 0
    %p132 = por %p130, %p131
    %p133 = scmp.ne.s32.totalorder %s119, %s120
    %p134 = scmp.eq.s32.totalorder %s18, 1
    %p135 = por %p133, %p134
    %p137 = scmp.ne.s32.totalorder %s120, %s136
    %p138 = scmp.eq.s32.totalorder %s18, 0
    %p139 = por %p137, %p138
    %s140 = ssub.s32 %s12, %s19
    %p141 = scmp.eq.s32.totalorder %s140, 0
    %s143 = sadd.s32 %s142, 1
    %s144 = scalar_select %p141, %s142, %s143
    %p147 = pneg %p141
    %p148 = scmp.eq.s32.totalorder %s12, 1
    %p149 = por %p147, %p148
    %p150 = scmp.ne.s32.totalorder %s142, %s145
    %p151 = scmp.eq.s32.totalorder %s12, 0
    %p152 = por %p150, %p151
    %p153 = scmp.ne.s32.totalorder %s142, %s145
    %p154 = scmp.eq.s32.totalorder %s17, 1
    %p155 = por %p153, %p154
    %p156 = scmp.ne.s32.totalorder %s145, %s146
    %p157 = scmp.eq.s32.totalorder %s17, 0
    %p158 = por %p156, %p157
    %p159 = scmp.ne.s32.totalorder %s145, %s146
    %p160 = scmp.eq.s32.totalorder %s18, 1
    %p161 = por %p159, %p160
    %p163 = scmp.ne.s32.totalorder %s146, %s162
    %p164 = scmp.eq.s32.totalorder %s18, 0
    %p165 = por %p163, %p164
    %p166 = scmp.le.s32.totalorder 1, %s12
    %p167 = scmp.lt.s32.totalorder %s12, 3
    %p168 = pnand %p166, %p167
    %p169 = pneg %p168
    // Predicated region
    $region9: #{lstm2d_forward.1} parent=5 // pred_check
      _
    $region10: #{lstm2d_forward.1} parent=5 // pred_check_branch
      %171 = sbr.rel (%p168) target = $region12
    $region11: #{lstm2d_forward.1} parent=5 // pred_region
      %s172 = ssub.s32 %s12, 1
      // Predicated region
      $region13: #{lstm2d_forward.1} parent=11 // pred_check
        %p173 = pneg %p33
      $region14: #{lstm2d_forward.1} parent=11 // pred_check_branch
        %175 = sbr.rel (%p173) target = $region16
      $region15: #{lstm2d_forward.1} parent=11 // pred_region
        _
      $region16: #{lstm2d_forward.1} parent=11 // pred_fallthru
        _
      // Predicated region
      $region17: #{lstm2d_forward.1} parent=11 // pred_check
        %p176 = pneg %p54
      $region18: #{lstm2d_forward.1} parent=11 // pred_check_branch
        %178 = sbr.rel (%p176) target = $region20
      $region19: #{lstm2d_forward.1} parent=11 // pred_region
        _
      $region20: #{lstm2d_forward.1} parent=11 // pred_fallthru
        _
    $region12: #{lstm2d_forward.1} parent=5 // pred_fallthru
      _
    %p179 = scmp.lt.s32.totalorder %s12, 2
    // Predicated region
    $region21: #{lstm2d_forward.1} parent=5 // pred_check
      %p180 = pneg %p179
    $region22: #{lstm2d_forward.1} parent=5 // pred_check_branch
      %182 = sbr.rel (%p180) target = $region24
    $region23: #{lstm2d_forward.1} parent=5 // pred_region
      // Predicated region
      $region25: #{lstm2d_forward.1} parent=23 // pred_check
        %p183 = pneg %p74
      $region26: #{lstm2d_forward.1} parent=23 // pred_check_branch
        %185 = sbr.rel (%p183) target = $region28
      $region27: #{lstm2d_forward.1} parent=23 // pred_region
        %p186 = scmp.lt.s32.totalorder %s12, 1
        %s187 = scalar_select %p186, %s12, 1
        %s188 = smul.addr %s187, 15
        %s189 = smul.addr %s188, 4
        %s190 = scalar_lea.vmem %s2, %s189
      $region28: #{lstm2d_forward.1} parent=23 // pred_fallthru
        _
      // Predicated region
      $region29: #{lstm2d_forward.1} parent=23 // pred_check
        %p191 = pneg %p100
      $region30: #{lstm2d_forward.1} parent=23 // pred_check_branch
        %193 = sbr.rel (%p191) target = $region32
      $region31: #{lstm2d_forward.1} parent=23 // pred_region
        %p194 = scmp.lt.s32.totalorder %s12, 1
        %s195 = scalar_select %p194, %s12, 1
        %s196 = smul.addr %s195, 12
        %s197 = smul.addr %s196, 8
        %s198 = scalar_lea.vmem %s3, %s197
      $region32: #{lstm2d_forward.1} parent=23 // pred_fallthru
        _
    $region24: #{lstm2d_forward.1} parent=5 // pred_fallthru
      _
    %p199 = scmp.le.s32.totalorder 1, %s12
    %p200 = scmp.lt.s32.totalorder %s12, 3
    %p201 = pnand %p199, %p200
    %p202 = pneg %p201
    // Predicated region
    $region33: #{lstm2d_forward.1} parent=5 // pred_check
      _
    $region34: #{lstm2d_forward.1} parent=5 // pred_check_branch
      %204 = sbr.rel (%p201) target = $region36
    $region35: #{lstm2d_forward.1} parent=5 // pred_region
      %s205 = ssub.s32 %s12, 1
      %p206 = pneg %p33
      %p207 = pneg %p30
      %p208 = pneg %p54
      %p209 = pneg %p51
      %p210 = scmp.lt.s32.totalorder %s17, 1
      %s211 = scalar_select %p210, %s17, 1
      %s212 = smul.addr %s211, 15
      %s213 = smul.addr %s212, 4
      %s214 = scalar_lea.vmem %s2, %s213
      %p215 = pneg %p80
      %p216 = pneg %p77
      %p217 = scmp.lt.s32.totalorder %s17, 1
      %s218 = scalar_select %p217, %s17, 1
      %s219 = smul.addr %s218, 12
      %s220 = smul.addr %s219, 8
      %s221 = scalar_lea.vmem %s3, %s220
      %p222 = pneg %p106
      %p223 = pneg %p103
      %p224 = pneg %p132
      %p225 = pneg %p129
      %p226 = scmp.lt.s32.totalorder %s17, 1
      %s227 = scalar_select %p226, %s17, 1
      %s228 = smul.addr %s227, 12
      %s229 = smul.addr %s228, 4
      %s230 = scalar_lea.vmem %s4, %s229
      %p231 = pneg %p158
      %p232 = pneg %p155
      %p233 = scmp.lt.s32.totalorder %s17, 1
      %s234 = scalar_select %p233, %s17, 1
      %s235 = smul.addr %s234, 12
      %s236 = smul.addr %s235, 8
      %s237 = scalar_lea.vmem %s5, %s236
      %p238 = scmp.lt.s32.totalorder %s17, 1
      %s239 = scalar_select %p238, %s17, 1
      %s240 = smul.addr %s239, 15
      %s241 = smul.addr %s240, 4
      %s242 = scalar_lea.vmem %s2, %s241
      %p243 = scmp.lt.s32.totalorder %s17, 1
      %s244 = scalar_select %p243, %s17, 1
      %s245 = smul.addr %s244, 12
      %s246 = smul.addr %s245, 8
      %s247 = scalar_lea.vmem %s3, %s246
      %p248 = scmp.lt.s32.totalorder %s17, 1
      %s249 = scalar_select %p248, %s17, 1
      %s250 = smul.addr %s249, 12
      %s251 = smul.addr %s250, 4
      %s252 = scalar_lea.vmem %s4, %s251
      %p253 = scmp.lt.s32.totalorder %s17, 1
      %s254 = scalar_select %p253, %s17, 1
      %s255 = smul.addr %s254, 12
      %s256 = smul.addr %s255, 8
      %s257 = scalar_lea.vmem %s5, %s256
      %v259 = vld [vmem:[%s242] sm:$0xff]
      %v260 = vld [vmem:[%s242 + $0x8] sm:$0xf]
      %v261 = vld [vmem:[%s242 + $0xc] sm:$0xff]
      %v262 = vld [vmem:[%s242 + $0x14] sm:$0xf]
      %v263 = vld [vmem:[%s242 + $0x18] sm:$0xff]
      %v264 = vld [vmem:[%s242 + $0x20] sm:$0xf]
      %v265 = vld [vmem:[%s242 + $0x24] sm:$0xff]
      %v266 = vld [vmem:[%s242 + $0x2c] sm:$0xf]
      %v267 = vld [vmem:[%s242 + $0x30] sm:$0x33]
      %v268 = vld [vmem:[%s242 + $0x38] sm:$0x3]
      %v269 = vld [vmem:[%s0] sm:$0xf]
      %v270 = vld [vmem:[%s0 + $0x4] sm:$0xf]
      %v271 = vld [vmem:[%s0 + $0x8] sm:$0xf]
      %v272 = vld [vmem:[%s0 + $0xc] sm:$0xf]
      %s273 = scalar_lea.vmem %s0, 16
      %v274 = vld [vmem:[%s273] sm:$0xf]
      %v275 = vld [vmem:[%s273 + $0x4] sm:$0xf]
      %v276 = vld [vmem:[%s273 + $0x8] sm:$0xf]
      %v277 = vld [vmem:[%s273 + $0xc] sm:$0xf]
      %v282 = vunpack.c.l.b16 %v274
      %v283 = vunpack.c.l.b16 %v275
      %v284 = vunpack.c.l.b16 %v276
      %v285 = vunpack.c.l.b16 %v277
      %v286 = vpack.c.b16 %v283, %v282
      %v287 = vpack.c.b16 %v285, %v284
      %v298 = vunpack.c.l.b16 %v259
      %v299 = vunpack.c.h.b16 %v259
      %v300 = vunpack.c.l.b16 %v260
      %v301 = vunpack.c.l.b16 %v261
      %v302 = vunpack.c.h.b16 %v261
      %v303 = vunpack.c.l.b16 %v262
      %v304 = vunpack.c.l.b16 %v263
      %v305 = vunpack.c.h.b16 %v263
      %v306 = vunpack.c.l.b16 %v264
      %v307 = vunpack.c.l.b16 %v265
      %v308 = vunpack.c.h.b16 %v265
      %v309 = vunpack.c.l.b16 %v266
      %v310 = vunpack.c.l.b16 %v267
      %v311 = vunpack.c.h.b16 %v267
      %v312 = vunpack.c.l.b16 %v268
      %v313 = vpack.c.b16 %v301, %v298
      %v314 = vpack.c.b16 %v302, %v299
      %v315 = vpack.c.b16 %v303, %v300
      %v316 = vpack.c.b16 %v307, %v304
      %v317 = vpack.c.b16 %v308, %v305
      %v318 = vpack.c.b16 %v309, %v306
      %v319 = vpack.c.b16 %v310, %v310
      %v320 = vpack.c.b16 %v311, %v311
      %v321 = vpack.c.b16 %v312, %v312
      %322 = vrot.lane.b32.xlu0 %v313, 127
      %v323 = vpop.permute.xlu0 %322
      %324 = vrot.lane.b32.xlu0 %v314, 127
      %v325 = vpop.permute.xlu0 %324
      %326 = vrot.lane.b32.xlu0 %v315, 127
      %v327 = vpop.permute.xlu0 %326
      %328 = vrot.lane.b32.xlu0 %v316, 127
      %v329 = vpop.permute.xlu0 %328
      %330 = vrot.lane.b32.xlu0 %v317, 127
      %v331 = vpop.permute.xlu0 %330
      %332 = vrot.lane.b32.xlu0 %v318, 127
      %v333 = vpop.permute.xlu0 %332
      %334 = vrot.lane.b32.xlu0 %v319, 127
      %v335 = vpop.permute.xlu0 %334
      %336 = vrot.lane.b32.xlu0 %v320, 127
      %v337 = vpop.permute.xlu0 %336
      %338 = vrot.lane.b32.xlu0 %v321, 127
      %v339 = vpop.permute.xlu0 %338
      %vm340 = vcmask 1039360
      %v341 = vsel %vm340, %v323, %v325
      %v342 = vsel %vm340, %v325, %v327
      %v343 = vsel %vm340, %v329, %v331
      %v344 = vsel %vm340, %v331, %v333
      %v345 = vsel %vm340, %v335, %v337
      %v346 = vsel %vm340, %v337, %v339
      %vm353 = vcmask 293888
      %v355 = vsel %vm353, %v286, 0
      %v358 = vsel %vm353, %v287, 0
      %vm360 = vcmask 1041408
      %v362 = vsel %vm360, %v345, 0
      %v365 = vsel %vm360, %v346, 0
      %v368 = vsel %vm360, %v339, 0
      %370 = vmatprep.subr.bf16.mxu0 %v342
      %371 = vmatpush1.bf16.msra.mxu0 %v341
      %372 = vmatprep.subr.bf16.mxu0 %v344
      %373 = vmatpush1.bf16.msra.mxu0 %v343
      %374 = vmatprep.subr.bf16.mxu0 %v365
      %375 = vmatpush1.bf16.msra.mxu0 %v362
      %376 = vmatprep.subr.bf16.mxu0 0
      %377 = vmatpush1.bf16.msra.mxu0 0
      %378 = vmatprep.subr.bf16.mxu0 0
      %379 = vmatpush1.bf16.msra.mxu0 0
      %380 = vmatprep.subr.bf16.mxu0 0
      %381 = vmatpush1.bf16.msra.mxu0 0
      %382 = vmatprep.subr.bf16.mxu0 0
      %383 = vmatpush1.bf16.msra.mxu0 0
      %384 = vmatprep.subr.bf16.mxu0 0
      %385 = vmatpush1.bf16.msra.mxu0 0
      %386 = vmatprep.subr.bf16.mxu0 0
      %387 = vmatpush1.bf16.msra.mxu0 0
      %388 = vmatprep.subr.bf16.mxu0 0
      %389 = vmatpush1.bf16.msra.mxu0 0
      %390 = vmatprep.subr.bf16.mxu0 0
      %391 = vmatpush1.bf16.msra.mxu0 0
      %392 = vmatprep.subr.bf16.mxu0 0
      %393 = vmatpush1.bf16.msra.mxu0 0
      %394 = vmatprep.subr.bf16.mxu0 0
      %395 = vmatpush1.bf16.msra.mxu0 0
      %396 = vmatprep.subr.bf16.mxu0 0
      %397 = vmatpush1.bf16.msra.mxu0 0
      %398 = vmatprep.subr.bf16.mxu0 0
      %399 = vmatpush1.bf16.msra.mxu0 0
      %400 = vmatprep.subr.bf16.mxu0 0
      %401 = vmatpush1.bf16.msra.mxu0 0
      %402 = vmatprep.mubr.bf16.mxu0 0
      %403 = vmatmul.mubr.bf16.gmra.mrb[0].mxu0 %v355
      %v404 = vpop.f32.mrb[0].mxu0
      %v405 = vadd.f32 0.0, %v404
      %v406 = vpop.f32.mrb[0].mxu0
      %v407 = vadd.f32 0.0, %v406
      %v408 = vpop.f32.mrb[0].mxu0
      %v409 = vadd.f32 0.0, %v408
      %v410 = vpop.f32.mrb[0].mxu0
      %v411 = vadd.f32 0.0, %v410
      %412 = vmatprep.mubr.bf16.mxu0 0
      %413 = vmatmul.mubr.bf16.gmra.mrb[0].mxu0 %v358
      %v414 = vpop.f32.mrb[0].mxu0
      %v415 = vadd.f32 0.0, %v414
      %v416 = vpop.f32.mrb[0].mxu0
      %v417 = vadd.f32 0.0, %v416
      %v418 = vpop.f32.mrb[0].mxu0
      %v419 = vadd.f32 0.0, %v418
      %v420 = vpop.f32.mrb[0].mxu0
      %v421 = vadd.f32 0.0, %v420
      %422 = vdwg.mxu0
      %423 = vmatprep.subr.bf16.mxu0 0
      %424 = vmatpush1.bf16.msra.mxu0 %v327
      %425 = vmatprep.subr.bf16.mxu0 0
      %426 = vmatpush1.bf16.msra.mxu0 %v333
      %427 = vmatprep.subr.bf16.mxu0 0
      %428 = vmatpush1.bf16.msra.mxu0 %v368
      %429 = vmatprep.subr.bf16.mxu0 0
      %430 = vmatpush1.bf16.msra.mxu0 0
      %431 = vmatprep.subr.bf16.mxu0 0
      %432 = vmatpush1.bf16.msra.mxu0 0
      %433 = vmatprep.subr.bf16.mxu0 0
      %434 = vmatpush1.bf16.msra.mxu0 0
      %435 = vmatprep.subr.bf16.mxu0 0
      %436 = vmatpush1.bf16.msra.mxu0 0
      %437 = vmatprep.subr.bf16.mxu0 0
      %438 = vmatpush1.bf16.msra.mxu0 0
      %439 = vmatprep.subr.bf16.mxu0 0
      %440 = vmatpush1.bf16.msra.mxu0 0
      %441 = vmatprep.subr.bf16.mxu0 0
      %442 = vmatpush1.bf16.msra.mxu0 0
      %443 = vmatprep.subr.bf16.mxu0 0
      %444 = vmatpush1.bf16.msra.mxu0 0
      %445 = vmatprep.subr.bf16.mxu0 0
      %446 = vmatpush1.bf16.msra.mxu0 0
      %447 = vmatprep.subr.bf16.mxu0 0
      %448 = vmatpush1.bf16.msra.mxu0 0
      %449 = vmatprep.subr.bf16.mxu0 0
      %450 = vmatpush1.bf16.msra.mxu0 0
      %451 = vmatprep.subr.bf16.mxu0 0
      %452 = vmatpush1.bf16.msra.mxu0 0
      %453 = vmatprep.subr.bf16.mxu0 0
      %454 = vmatpush1.bf16.msra.mxu0 0
      %455 = vmatprep.mubr.bf16.mxu0 0
      %456 = vmatmul.mubr.bf16.gmra.mrb[0].mxu0 %v355
      %v457 = vpop.f32.mrb[0].mxu0
      %v458 = vadd.f32 0.0, %v457
      %v459 = vpop.f32.mrb[0].mxu0
      %v460 = vpop.f32.mrb[0].mxu0
      %v461 = vadd.f32 0.0, %v460
      %v462 = vpop.f32.mrb[0].mxu0
      %463 = vmatprep.mubr.bf16.mxu0 0
      %464 = vmatmul.mubr.bf16.gmra.mrb[0].mxu0 %v358
      %v465 = vpop.f32.mrb[0].mxu0
      %v466 = vadd.f32 0.0, %v465
      %v467 = vpop.f32.mrb[0].mxu0
      %v468 = vpop.f32.mrb[0].mxu0
      %v469 = vadd.f32 0.0, %v468
      %v470 = vpop.f32.mrb[0].mxu0
      %471 = vdwg.mxu0
      %v476 = vunpack.c.l.b16 %v269
      %v477 = vunpack.c.l.b16 %v270
      %v478 = vunpack.c.l.b16 %v271
      %v479 = vunpack.c.l.b16 %v272
      %v480 = vpack.c.b16 %v477, %v476
      %v481 = vpack.c.b16 %v479, %v478
      %v489 = vsel %vm353, %v480, 0
      %v492 = vsel %vm353, %v481, 0
      %v495 = vsel %vm360, %v319, 0
      %v498 = vsel %vm360, %v320, 0
      %v501 = vsel %vm360, %v321, 0
      %503 = vmatprep.subr.bf16.mxu0 %v314
      %504 = vmatpush1.bf16.msra.mxu0 %v313
      %505 = vmatprep.subr.bf16.mxu0 %v317
      %506 = vmatpush1.bf16.msra.mxu0 %v316
      %507 = vmatprep.subr.bf16.mxu0 %v498
      %508 = vmatpush1.bf16.msra.mxu0 %v495
      %509 = vmatprep.subr.bf16.mxu0 0
      %510 = vmatpush1.bf16.msra.mxu0 0
      %511 = vmatprep.subr.bf16.mxu0 0
      %512 = vmatpush1.bf16.msra.mxu0 0
      %513 = vmatprep.subr.bf16.mxu0 0
      %514 = vmatpush1.bf16.msra.mxu0 0
      %515 = vmatprep.subr.bf16.mxu0 0
      %516 = vmatpush1.bf16.msra.mxu0 0
      %517 = vmatprep.subr.bf16.mxu0 0
      %518 = vmatpush1.bf16.msra.mxu0 0
      %519 = vmatprep.subr.bf16.mxu0 0
      %520 = vmatpush1.bf16.msra.mxu0 0
      %521 = vmatprep.subr.bf16.mxu0 0
      %522 = vmatpush1.bf16.msra.mxu0 0
      %523 = vmatprep.subr.bf16.mxu0 0
      %524 = vmatpush1.bf16.msra.mxu0 0
      %525 = vmatprep.subr.bf16.mxu0 0
      %526 = vmatpush1.bf16.msra.mxu0 0
      %527 = vmatprep.subr.bf16.mxu0 0
      %528 = vmatpush1.bf16.msra.mxu0 0
      %529 = vmatprep.subr.bf16.mxu0 0
      %530 = vmatpush1.bf16.msra.mxu0 0
      %531 = vmatprep.subr.bf16.mxu0 0
      %532 = vmatpush1.bf16.msra.mxu0 0
      %533 = vmatprep.subr.bf16.mxu0 0
      %534 = vmatpush1.bf16.msra.mxu0 0
      %535 = vmatprep.mubr.bf16.mxu0 0
      %536 = vmatmul.mubr.bf16.gmra.mrb[0].mxu0 %v489
      %v537 = vpop.f32.mrb[0].mxu0
      %v538 = vadd.f32 %v405, %v537
      %v539 = vpop.f32.mrb[0].mxu0
      %v540 = vadd.f32 %v407, %v539
      %v541 = vpop.f32.mrb[0].mxu0
      %v542 = vadd.f32 %v409, %v541
      %v543 = vpop.f32.mrb[0].mxu0
      %v544 = vadd.f32 %v411, %v543
      %545 = vmatprep.mubr.bf16.mxu0 0
      %546 = vmatmul.mubr.bf16.gmra.mrb[0].mxu0 %v492
      %v547 = vpop.f32.mrb[0].mxu0
      %v548 = vadd.f32 %v415, %v547
      %v549 = vpop.f32.mrb[0].mxu0
      %v550 = vadd.f32 %v417, %v549
      %v551 = vpop.f32.mrb[0].mxu0
      %v552 = vadd.f32 %v419, %v551
      %v553 = vpop.f32.mrb[0].mxu0
      %v554 = vadd.f32 %v421, %v553
      %555 = vdwg.mxu0
      %556 = vmatprep.subr.bf16.mxu0 0
      %557 = vmatpush1.bf16.msra.mxu0 %v315
      %558 = vmatprep.subr.bf16.mxu0 0
      %559 = vmatpush1.bf16.msra.mxu0 %v318
      %560 = vmatprep.subr.bf16.mxu0 0
      %561 = vmatpush1.bf16.msra.mxu0 %v501
      %562 = vmatprep.subr.bf16.mxu0 0
      %563 = vmatpush1.bf16.msra.mxu0 0
      %564 = vmatprep.subr.bf16.mxu0 0
      %565 = vmatpush1.bf16.msra.mxu0 0
      %566 = vmatprep.subr.bf16.mxu0 0
      %567 = vmatpush1.bf16.msra.mxu0 0
      %568 = vmatprep.subr.bf16.mxu0 0
      %569 = vmatpush1.bf16.msra.mxu0 0
      %570 = vmatprep.subr.bf16.mxu0 0
      %571 = vmatpush1.bf16.msra.mxu0 0
      %572 = vmatprep.subr.bf16.mxu0 0
      %573 = vmatpush1.bf16.msra.mxu0 0
      %574 = vmatprep.subr.bf16.mxu0 0
      %575 = vmatpush1.bf16.msra.mxu0 0
      %576 = vmatprep.subr.bf16.mxu0 0
      %577 = vmatpush1.bf16.msra.mxu0 0
      %578 = vmatprep.subr.bf16.mxu0 0
      %579 = vmatpush1.bf16.msra.mxu0 0
      %580 = vmatprep.subr.bf16.mxu0 0
      %581 = vmatpush1.bf16.msra.mxu0 0
      %582 = vmatprep.subr.bf16.mxu0 0
      %583 = vmatpush1.bf16.msra.mxu0 0
      %584 = vmatprep.subr.bf16.mxu0 0
      %585 = vmatpush1.bf16.msra.mxu0 0
      %586 = vmatprep.subr.bf16.mxu0 0
      %587 = vmatpush1.bf16.msra.mxu0 0
      %588 = vmatprep.mubr.bf16.mxu0 0
      %589 = vmatmul.mubr.bf16.gmra.mrb[0].mxu0 %v489
      %v590 = vpop.f32.mrb[0].mxu0
      %v591 = vadd.f32 %v458, %v590
      %v592 = vpop.f32.mrb[0].mxu0
      %v593 = vpop.f32.mrb[0].mxu0
      %v594 = vadd.f32 %v461, %v593
      %v595 = vpop.f32.mrb[0].mxu0
      %596 = vmatprep.mubr.bf16.mxu0 0
      %597 = vmatmul.mubr.bf16.gmra.mrb[0].mxu0 %v492
      %v598 = vpop.f32.mrb[0].mxu0
      %v599 = vadd.f32 %v466, %v598
      %v600 = vpop.f32.mrb[0].mxu0
      %v601 = vpop.f32.mrb[0].mxu0
      %v602 = vadd.f32 %v469, %v601
      %v603 = vpop.f32.mrb[0].mxu0
      %604 = vdwg.mxu0
      %s605 = scalar_lea.vmem %s0, 32
      %v606 = vld [vmem:[%s605] sm:$0xf]
      %v607 = vld [vmem:[%s605 + $0x4] sm:$0xf]
      %v608 = vld [vmem:[%s605 + $0x8] sm:$0xf]
      %v609 = vld [vmem:[%s605 + $0xc] sm:$0xf]
      %v614 = vunpack.c.l.b16 %v606
      %v615 = vunpack.c.l.b16 %v607
      %v616 = vunpack.c.l.b16 %v608
      %v617 = vunpack.c.l.b16 %v609
      %v618 = vpack.c.b16 %v615, %v614
      %v619 = vpack.c.b16 %v617, %v616
      %620 = vrot.lane.b32.xlu0 %v313, 126
      %v621 = vpop.permute.xlu0 %620
      %622 = vrot.lane.b32.xlu0 %v314, 126
      %v623 = vpop.permute.xlu0 %622
      %624 = vrot.lane.b32.xlu0 %v315, 126
      %v625 = vpop.permute.xlu0 %624
      %626 = vrot.lane.b32.xlu0 %v316, 126
      %v627 = vpop.permute.xlu0 %626
      %628 = vrot.lane.b32.xlu0 %v317, 126
      %v629 = vpop.permute.xlu0 %628
      %630 = vrot.lane.b32.xlu0 %v318, 126
      %v631 = vpop.permute.xlu0 %630
      %632 = vrot.lane.b32.xlu0 %v319, 126
      %v633 = vpop.permute.xlu0 %632
      %634 = vrot.lane.b32.xlu0 %v320, 126
      %v635 = vpop.permute.xlu0 %634
      %636 = vrot.lane.b32.xlu0 %v321, 126
      %v637 = vpop.permute.xlu0 %636
      %vm638 = vcmask 1031168
      %v639 = vsel %vm638, %v621, %v623
      %v640 = vsel %vm638, %v623, %v625
      %v641 = vsel %vm638, %v627, %v629
      %v642 = vsel %vm638, %v629, %v631
      %v643 = vsel %vm638, %v633, %v635
      %v644 = vsel %vm638, %v635, %v637
      %v652 = vsel %vm353, %v618, 0
      %v655 = vsel %vm353, %v619, 0
      %v658 = vsel %vm360, %v643, 0
      %v661 = vsel %vm360, %v644, 0
      %v664 = vsel %vm360, %v637, 0
      %666 = vmatprep.subr.bf16.mxu0 %v640
      %667 = vmatpush1.bf16.msra.mxu0 %v639
      %668 = vmatprep.subr.bf16.mxu0 %v642
      %669 = vmatpush1.bf16.msra.mxu0 %v641
      %670 = vmatprep.subr.bf16.mxu0 %v661
      %671 = vmatpush1.bf16.msra.mxu0 %v658
      %672 = vmatprep.subr.bf16.mxu0 0
      %673 = vmatpush1.bf16.msra.mxu0 0
      %674 = vmatprep.subr.bf16.mxu0 0
      %675 = vmatpush1.bf16.msra.mxu0 0
      %676 = vmatprep.subr.bf16.mxu0 0
      %677 = vmatpush1.bf16.msra.mxu0 0
      %678 = vmatprep.subr.bf16.mxu0 0
      %679 = vmatpush1.bf16.msra.mxu0 0
      %680 = vmatprep.subr.bf16.mxu0 0
      %681 = vmatpush1.bf16.msra.mxu0 0
      %682 = vmatprep.subr.bf16.mxu0 0
      %683 = vmatpush1.bf16.msra.mxu0 0
      %684 = vmatprep.subr.bf16.mxu0 0
      %685 = vmatpush1.bf16.msra.mxu0 0
      %686 = vmatprep.subr.bf16.mxu0 0
      %687 = vmatpush1.bf16.msra.mxu0 0
      %688 = vmatprep.subr.bf16.mxu0 0
      %689 = vmatpush1.bf16.msra.mxu0 0
      %690 = vmatprep.subr.bf16.mxu0 0
      %691 = vmatpush1.bf16.msra.mxu0 0
      %692 = vmatprep.subr.bf16.mxu0 0
      %693 = vmatpush1.bf16.msra.mxu0 0
      %694 = vmatprep.subr.bf16.mxu0 0
      %695 = vmatpush1.bf16.msra.mxu0 0
      %696 = vmatprep.subr.bf16.mxu0 0
      %697 = vmatpush1.bf16.msra.mxu0 0
      %698 = vmatprep.mubr.bf16.mxu0 0
      %699 = vmatmul.mubr.bf16.gmra.mrb[0].mxu0 %v652
      %v700 = vpop.f32.mrb[0].mxu0
      %v701 = vadd.f32 0.0, %v700
      %v702 = vpop.f32.mrb[0].mxu0
      %v703 = vadd.f32 0.0, %v702
      %v704 = vpop.f32.mrb[0].mxu0
      %v705 = vadd.f32 0.0, %v704
      %v706 = vpop.f32.mrb[0].mxu0
      %v707 = vadd.f32 0.0, %v706
      %708 = vmatprep.mubr.bf16.mxu0 0
      %709 = vmatmul.mubr.bf16.gmra.mrb[0].mxu0 %v655
      %v710 = vpop.f32.mrb[0].mxu0
      %v711 = vadd.f32 0.0, %v710
      %v712 = vpop.f32.mrb[0].mxu0
      %v713 = vadd.f32 0.0, %v712
      %v714 = vpop.f32.mrb[0].mxu0
      %v715 = vadd.f32 0.0, %v714
      %v716 = vpop.f32.mrb[0].mxu0
      %v717 = vadd.f32 0.0, %v716
      %718 = vdwg.mxu0
      %719 = vmatprep.subr.bf16.mxu0 0
      %720 = vmatpush1.bf16.msra.mxu0 %v625
      %721 = vmatprep.subr.bf16.mxu0 0
      %722 = vmatpush1.bf16.msra.mxu0 %v631
      %723 = vmatprep.subr.bf16.mxu0 0
      %724 = vmatpush1.bf16.msra.mxu0 %v664
      %725 = vmatprep.subr.bf16.mxu0 0
      %726 = vmatpush1.bf16.msra.mxu0 0
      %727 = vmatprep.subr.bf16.mxu0 0
      %728 = vmatpush1.bf16.msra.mxu0 0
      %729 = vmatprep.subr.bf16.mxu0 0
      %730 = vmatpush1.bf16.msra.mxu0 0
      %731 = vmatprep.subr.bf16.mxu0 0
      %732 = vmatpush1.bf16.msra.mxu0 0
      %733 = vmatprep.subr.bf16.mxu0 0
      %734 = vmatpush1.bf16.msra.mxu0 0
      %735 = vmatprep.subr.bf16.mxu0 0
      %736 = vmatpush1.bf16.msra.mxu0 0
      %737 = vmatprep.subr.bf16.mxu0 0
      %738 = vmatpush1.bf16.msra.mxu0 0
      %739 = vmatprep.subr.bf16.mxu0 0
      %740 = vmatpush1.bf16.msra.mxu0 0
      %741 = vmatprep.subr.bf16.mxu0 0
      %742 = vmatpush1.bf16.msra.mxu0 0
      %743 = vmatprep.subr.bf16.mxu0 0
      %744 = vmatpush1.bf16.msra.mxu0 0
      %745 = vmatprep.subr.bf16.mxu0 0
      %746 = vmatpush1.bf16.msra.mxu0 0
      %747 = vmatprep.subr.bf16.mxu0 0
      %748 = vmatpush1.bf16.msra.mxu0 0
      %749 = vmatprep.subr.bf16.mxu0 0
      %750 = vmatpush1.bf16.msra.mxu0 0
      %751 = vmatprep.mubr.bf16.mxu0 0
      %752 = vmatmul.mubr.bf16.gmra.mrb[0].mxu0 %v652
      %v753 = vpop.f32.mrb[0].mxu0
      %v754 = vadd.f32 0.0, %v753
      %v755 = vpop.f32.mrb[0].mxu0
      %v756 = vpop.f32.mrb[0].mxu0
      %v757 = vadd.f32 0.0, %v756
      %v758 = vpop.f32.mrb[0].mxu0
      %759 = vmatprep.mubr.bf16.mxu0 0
      %760 = vmatmul.mubr.bf16.gmra.mrb[0].mxu0 %v655
      %v761 = vpop.f32.mrb[0].mxu0
      %v762 = vadd.f32 0.0, %v761
      %v763 = vpop.f32.mrb[0].mxu0
      %v764 = vpop.f32.mrb[0].mxu0
      %v765 = vadd.f32 0.0, %v764
      %v766 = vpop.f32.mrb[0].mxu0
      %767 = vdwg.mxu0
      %v768 = vadd.f32 %v538, %v701
      %v769 = vadd.f32 %v540, %v703
      %v770 = vadd.f32 %v591, %v754
      %v771 = vadd.f32 %v542, %v705
      %v772 = vadd.f32 %v544, %v707
      %v773 = vadd.f32 %v594, %v757
      %v774 = vadd.f32 %v548, %v711
      %v775 = vadd.f32 %v550, %v713
      %v776 = vadd.f32 %v599, %v762
      %v777 = vadd.f32 %v552, %v715
      %v778 = vadd.f32 %v554, %v717
      %v779 = vadd.f32 %v602, %v765
      %s780 = scalar_lea.vmem %s0, 48
      %v781 = vld [vmem:[%s780] sm:$0xf]
      %v782 = vld [vmem:[%s780 + $0x4] sm:$0xf]
      %v783 = vld [vmem:[%s780 + $0x8] sm:$0xf]
      %v784 = vld [vmem:[%s780 + $0xc] sm:$0xf]
      %v789 = vunpack.c.l.b16 %v781
      %v790 = vunpack.c.l.b16 %v782
      %v791 = vunpack.c.l.b16 %v783
      %v792 = vunpack.c.l.b16 %v784
      %v793 = vpack.c.b16 %v790, %v789
      %v794 = vpack.c.b16 %v792, %v791
      %795 = vrot.lane.b32.xlu0 %v313, 110
      %v796 = vpop.permute.xlu0 %795
      %797 = vrot.lane.b32.xlu0 %v314, 110
      %v798 = vpop.permute.xlu0 %797
      %799 = vrot.lane.b32.xlu0 %v315, 110
      %v800 = vpop.permute.xlu0 %799
      %801 = vrot.lane.b32.xlu0 %v316, 110
      %v802 = vpop.permute.xlu0 %801
      %803 = vrot.lane.b32.xlu0 %v317, 110
      %v804 = vpop.permute.xlu0 %803
      %805 = vrot.lane.b32.xlu0 %v318, 110
      %v806 = vpop.permute.xlu0 %805
      %807 = vrot.lane.b32.xlu0 %v319, 110
      %v808 = vpop.permute.xlu0 %807
      %809 = vrot.lane.b32.xlu0 %v320, 110
      %v810 = vpop.permute.xlu0 %809
      %811 = vrot.lane.b32.xlu0 %v321, 110
      %v812 = vpop.permute.xlu0 %811
      %vm813 = vcmask 900096
      %v814 = vsel %vm813, %v796, %v798
      %v815 = vsel %vm813, %v798, %v800
      %v816 = vsel %vm813, %v802, %v804
      %v817 = vsel %vm813, %v804, %v806
      %v818 = vsel %vm813, %v808, %v810
      %v819 = vsel %vm813, %v810, %v812
      %v827 = vsel %vm353, %v793, 0
      %v830 = vsel %vm353, %v794, 0
      %v833 = vsel %vm360, %v818, 0
      %v836 = vsel %vm360, %v819, 0
      %v839 = vsel %vm360, %v812, 0
      %841 = vmatprep.subr.bf16.mxu0 %v815
      %842 = vmatpush1.bf16.msra.mxu0 %v814
      %843 = vmatprep.subr.bf16.mxu0 %v817
      %844 = vmatpush1.bf16.msra.mxu0 %v816
      %845 = vmatprep.subr.bf16.mxu0 %v836
      %846 = vmatpush1.bf16.msra.mxu0 %v833
      %847 = vmatprep.subr.bf16.mxu0 0
      %848 = vmatpush1.bf16.msra.mxu0 0
      %849 = vmatprep.subr.bf16.mxu0 0
      %850 = vmatpush1.bf16.msra.mxu0 0
      %851 = vmatprep.subr.bf16.mxu0 0
      %852 = vmatpush1.bf16.msra.mxu0 0
      %853 = vmatprep.subr.bf16.mxu0 0
      %854 = vmatpush1.bf16.msra.mxu0 0
      %855 = vmatprep.subr.bf16.mxu0 0
      %856 = vmatpush1.bf16.msra.mxu0 0
      %857 = vmatprep.subr.bf16.mxu0 0
      %858 = vmatpush1.bf16.msra.mxu0 0
      %859 = vmatprep.subr.bf16.mxu0 0
      %860 = vmatpush1.bf16.msra.mxu0 0
      %861 = vmatprep.subr.bf16.mxu0 0
      %862 = vmatpush1.bf16.msra.mxu0 0
      %863 = vmatprep.subr.bf16.mxu0 0
      %864 = vmatpush1.bf16.msra.mxu0 0
      %865 = vmatprep.subr.bf16.mxu0 0
      %866 = vmatpush1.bf16.msra.mxu0 0
      %867 = vmatprep.subr.bf16.mxu0 0
      %868 = vmatpush1.bf16.msra.mxu0 0
      %869 = vmatprep.subr.bf16.mxu0 0
      %870 = vmatpush1.bf16.msra.mxu0 0
      %871 = vmatprep.subr.bf16.mxu0 0
      %872 = vmatpush1.bf16.msra.mxu0 0
      %873 = vmatprep.mubr.bf16.mxu0 0
      %874 = vmatmul.mubr.bf16.gmra.mrb[0].mxu0 %v827
      %v875 = vpop.f32.mrb[0].mxu0
      %v876 = vadd.f32 0.0, %v875
      %v877 = vpop.f32.mrb[0].mxu0
      %v878 = vadd.f32 0.0, %v877
      %v879 = vpop.f32.mrb[0].mxu0
      %v880 = vadd.f32 0.0, %v879
      %v881 = vpop.f32.mrb[0].mxu0
      %v882 = vadd.f32 0.0, %v881
      %883 = vmatprep.mubr.bf16.mxu0 0
      %884 = vmatmul.mubr.bf16.gmra.mrb[0].mxu0 %v830
      %v885 = vpop.f32.mrb[0].mxu0
      %v886 = vadd.f32 0.0, %v885
      %v887 = vpop.f32.mrb[0].mxu0
      %v888 = vadd.f32 0.0, %v887
      %v889 = vpop.f32.mrb[0].mxu0
      %v890 = vadd.f32 0.0, %v889
      %v891 = vpop.f32.mrb[0].mxu0
      %v892 = vadd.f32 0.0, %v891
      %893 = vdwg.mxu0
      %894 = vmatprep.subr.bf16.mxu0 0
      %895 = vmatpush1.bf16.msra.mxu0 %v800
      %896 = vmatprep.subr.bf16.mxu0 0
      %897 = vmatpush1.bf16.msra.mxu0 %v806
      %898 = vmatprep.subr.bf16.mxu0 0
      %899 = vmatpush1.bf16.msra.mxu0 %v839
      %900 = vmatprep.subr.bf16.mxu0 0
      %901 = vmatpush1.bf16.msra.mxu0 0
      %902 = vmatprep.subr.bf16.mxu0 0
      %903 = vmatpush1.bf16.msra.mxu0 0
      %904 = vmatprep.subr.bf16.mxu0 0
      %905 = vmatpush1.bf16.msra.mxu0 0
      %906 = vmatprep.subr.bf16.mxu0 0
      %907 = vmatpush1.bf16.msra.mxu0 0
      %908 = vmatprep.subr.bf16.mxu0 0
      %909 = vmatpush1.bf16.msra.mxu0 0
      %910 = vmatprep.subr.bf16.mxu0 0
      %911 = vmatpush1.bf16.msra.mxu0 0
      %912 = vmatprep.subr.bf16.mxu0 0
      %913 = vmatpush1.bf16.msra.mxu0 0
      %914 = vmatprep.subr.bf16.mxu0 0
      %915 = vmatpush1.bf16.msra.mxu0 0
      %916 = vmatprep.subr.bf16.mxu0 0
      %917 = vmatpush1.bf16.msra.mxu0 0
      %918 = vmatprep.subr.bf16.mxu0 0
      %919 = vmatpush1.bf16.msra.mxu0 0
      %920 = vmatprep.subr.bf16.mxu0 0
      %921 = vmatpush1.bf16.msra.mxu0 0
      %922 = vmatprep.subr.bf16.mxu0 0
      %923 = vmatpush1.bf16.msra.mxu0 0
      %924 = vmatprep.subr.bf16.mxu0 0
      %925 = vmatpush1.bf16.msra.mxu0 0
      %926 = vmatprep.mubr.bf16.mxu0 0
      %927 = vmatmul.mubr.bf16.gmra.mrb[0].mxu0 %v827
      %v928 = vpop.f32.mrb[0].mxu0
      %v929 = vadd.f32 0.0, %v928
      %v930 = vpop.f32.mrb[0].mxu0
      %v931 = vpop.f32.mrb[0].mxu0
      %v932 = vadd.f32 0.0, %v931
      %v933 = vpop.f32.mrb[0].mxu0
      %934 = vmatprep.mubr.bf16.mxu0 0
      %935 = vmatmul.mubr.bf16.gmra.mrb[0].mxu0 %v830
      %v936 = vpop.f32.mrb[0].mxu0
      %v937 = vadd.f32 0.0, %v936
      %v938 = vpop.f32.mrb[0].mxu0
      %v939 = vpop.f32.mrb[0].mxu0
      %v940 = vadd.f32 0.0, %v939
      %v941 = vpop.f32.mrb[0].mxu0
      %942 = vdwg.mxu0
      %v943 = vadd.f32 %v768, %v876
      %v944 = vadd.f32 %v769, %v878
      %v945 = vadd.f32 %v770, %v929
      %v946 = vadd.f32 %v771, %v880
      %v947 = vadd.f32 %v772, %v882
      %v948 = vadd.f32 %v773, %v932
      %v949 = vadd.f32 %v774, %v886
      %v950 = vadd.f32 %v775, %v888
      %v951 = vadd.f32 %v776, %v937
      %v952 = vadd.f32 %v777, %v890
      %v953 = vadd.f32 %v778, %v892
      %v954 = vadd.f32 %v779, %v940
      %s955 = scalar_lea.vmem %s0, 64
      %v956 = vld [vmem:[%s955] sm:$0xf]
      %v957 = vld [vmem:[%s955 + $0x4] sm:$0xf]
      %v958 = vld [vmem:[%s955 + $0x8] sm:$0xf]
      %v959 = vld [vmem:[%s955 + $0xc] sm:$0xf]
      %v964 = vunpack.c.l.b16 %v956
      %v965 = vunpack.c.l.b16 %v957
      %v966 = vunpack.c.l.b16 %v958
      %v967 = vunpack.c.l.b16 %v959
      %v968 = vpack.c.b16 %v965, %v964
      %v969 = vpack.c.b16 %v967, %v966
      %970 = vrot.lane.b32.xlu0 %v313, 109
      %v971 = vpop.permute.xlu0 %970
      %972 = vrot.lane.b32.xlu0 %v314, 109
      %v973 = vpop.permute.xlu0 %972
      %974 = vrot.lane.b32.xlu0 %v315, 109
      %v975 = vpop.permute.xlu0 %974
      %976 = vrot.lane.b32.xlu0 %v316, 109
      %v977 = vpop.permute.xlu0 %976
      %978 = vrot.lane.b32.xlu0 %v317, 109
      %v979 = vpop.permute.xlu0 %978
      %980 = vrot.lane.b32.xlu0 %v318, 109
      %v981 = vpop.permute.xlu0 %980
      %982 = vrot.lane.b32.xlu0 %v319, 109
      %v983 = vpop.permute.xlu0 %982
      %984 = vrot.lane.b32.xlu0 %v320, 109
      %v985 = vpop.permute.xlu0 %984
      %986 = vrot.lane.b32.xlu0 %v321, 109
      %v987 = vpop.permute.xlu0 %986
      %vm988 = vcmask 891904
      %v989 = vsel %vm988, %v971, %v973
      %v990 = vsel %vm988, %v973, %v975
      %v991 = vsel %vm988, %v977, %v979
      %v992 = vsel %vm988, %v979, %v981
      %v993 = vsel %vm988, %v983, %v985
      %v994 = vsel %vm988, %v985, %v987
      %v1002 = vsel %vm353, %v968, 0
      %v1005 = vsel %vm353, %v969, 0
      %v1008 = vsel %vm360, %v993, 0
      %v1011 = vsel %vm360, %v994, 0
      %v1014 = vsel %vm360, %v987, 0
      %1016 = vmatprep.subr.bf16.mxu0 %v990
      %1017 = vmatpush1.bf16.msra.mxu0 %v989
      %1018 = vmatprep.subr.bf16.mxu0 %v992
      %1019 = vmatpush1.bf16.msra.mxu0 %v991
      %1020 = vmatprep.subr.bf16.mxu0 %v1011
      %1021 = vmatpush1.bf16.msra.mxu0 %v1008
      %1022 = vmatprep.subr.bf16.mxu0 0
      %1023 = vmatpush1.bf16.msra.mxu0 0
      %1024 = vmatprep.subr.bf16.mxu0 0
      %1025 = vmatpush1.bf16.msra.mxu0 0
      %1026 = vmatprep.subr.bf16.mxu0 0
      %1027 = vmatpush1.bf16.msra.mxu0 0
      %1028 = vmatprep.subr.bf16.mxu0 0
      %1029 = vmatpush1.bf16.msra.mxu0 0
      %1030 = vmatprep.subr.bf16.mxu0 0
      %1031 = vmatpush1.bf16.msra.mxu0 0
      %1032 = vmatprep.subr.bf16.mxu0 0
      %1033 = vmatpush1.bf16.msra.mxu0 0
      %1034 = vmatprep.subr.bf16.mxu0 0
      %1035 = vmatpush1.bf16.msra.mxu0 0
      %1036 = vmatprep.subr.bf16.mxu0 0
      %1037 = vmatpush1.bf16.msra.mxu0 0
      %1038 = vmatprep.subr.bf16.mxu0 0
      %1039 = vmatpush1.bf16.msra.mxu0 0
      %1040 = vmatprep.subr.bf16.mxu0 0
      %1041 = vmatpush1.bf16.msra.mxu0 0
      %1042 = vmatprep.subr.bf16.mxu0 0
      %1043 = vmatpush1.bf16.msra.mxu0 0
      %1044 = vmatprep.subr.bf16.mxu0 0
      %1045 = vmatpush1.bf16.msra.mxu0 0
      %1046 = vmatprep.subr.bf16.mxu0 0
      %1047 = vmatpush1.bf16.msra.mxu0 0
      %1048 = vmatprep.mubr.bf16.mxu0 0
      %1049 = vmatmul.mubr.bf16.gmra.mrb[0].mxu0 %v1002
      %v1050 = vpop.f32.mrb[0].mxu0
      %v1051 = vadd.f32 0.0, %v1050
      %v1052 = vpop.f32.mrb[0].mxu0
      %v1053 = vadd.f32 0.0, %v1052
      %v1054 = vpop.f32.mrb[0].mxu0
      %v1055 = vadd.f32 0.0, %v1054
      %v1056 = vpop.f32.mrb[0].mxu0
      %v1057 = vadd.f32 0.0, %v1056
      %1058 = vmatprep.mubr.bf16.mxu0 0
      %1059 = vmatmul.mubr.bf16.gmra.mrb[0].mxu0 %v1005
      %v1060 = vpop.f32.mrb[0].mxu0
      %v1061 = vadd.f32 0.0, %v1060
      %v1062 = vpop.f32.mrb[0].mxu0
      %v1063 = vadd.f32 0.0, %v1062
      %v1064 = vpop.f32.mrb[0].mxu0
      %v1065 = vadd.f32 0.0, %v1064
      %v1066 = vpop.f32.mrb[0].mxu0
      %v1067 = vadd.f32 0.0, %v1066
      %1068 = vdwg.mxu0
      %1069 = vmatprep.subr.bf16.mxu0 0
      %1070 = vmatpush1.bf16.msra.mxu0 %v975
      %1071 = vmatprep.subr.bf16.mxu0 0
      %1072 = vmatpush1.bf16.msra.mxu0 %v981
      %1073 = vmatprep.subr.bf16.mxu0 0
      %1074 = vmatpush1.bf16.msra.mxu0 %v1014
      %1075 = vmatprep.subr.bf16.mxu0 0
      %1076 = vmatpush1.bf16.msra.mxu0 0
      %1077 = vmatprep.subr.bf16.mxu0 0
      %1078 = vmatpush1.bf16.msra.mxu0 0
      %1079 = vmatprep.subr.bf16.mxu0 0
      %1080 = vmatpush1.bf16.msra.mxu0 0
      %1081 = vmatprep.subr.bf16.mxu0 0
      %1082 = vmatpush1.bf16.msra.mxu0 0
      %1083 = vmatprep.subr.bf16.mxu0 0
      %1084 = vmatpush1.bf16.msra.mxu0 0
      %1085 = vmatprep.subr.bf16.mxu0 0
      %1086 = vmatpush1.bf16.msra.mxu0 0
      %1087 = vmatprep.subr.bf16.mxu0 0
      %1088 = vmatpush1.bf16.msra.mxu0 0
      %1089 = vmatprep.subr.bf16.mxu0 0
      %1090 = vmatpush1.bf16.msra.mxu0 0
      %1091 = vmatprep.subr.bf16.mxu0 0
      %1092 = vmatpush1.bf16.msra.mxu0 0
      %1093 = vmatprep.subr.bf16.mxu0 0
      %1094 = vmatpush1.bf16.msra.mxu0 0
      %1095 = vmatprep.subr.bf16.mxu0 0
      %1096 = vmatpush1.bf16.msra.mxu0 0
      %1097 = vmatprep.subr.bf16.mxu0 0
      %1098 = vmatpush1.bf16.msra.mxu0 0
      %1099 = vmatprep.subr.bf16.mxu0 0
      %1100 = vmatpush1.bf16.msra.mxu0 0
      %1101 = vmatprep.mubr.bf16.mxu0 0
      %1102 = vmatmul.mubr.bf16.gmra.mrb[0].mxu0 %v1002
      %v1103 = vpop.f32.mrb[0].mxu0
      %v1104 = vadd.f32 0.0, %v1103
      %v1105 = vpop.f32.mrb[0].mxu0
      %v1106 = vpop.f32.mrb[0].mxu0
      %v1107 = vadd.f32 0.0, %v1106
      %v1108 = vpop.f32.mrb[0].mxu0
      %1109 = vmatprep.mubr.bf16.mxu0 0
      %1110 = vmatmul.mubr.bf16.gmra.mrb[0].mxu0 %v1005
      %v1111 = vpop.f32.mrb[0].mxu0
      %v1112 = vadd.f32 0.0, %v1111
      %v1113 = vpop.f32.mrb[0].mxu0
      %v1114 = vpop.f32.mrb[0].mxu0
      %v1115 = vadd.f32 0.0, %v1114
      %v1116 = vpop.f32.mrb[0].mxu0
      %1117 = vdwg.mxu0
      %v1118 = vadd.f32 %v943, %v1051
      %v1119 = vadd.f32 %v944, %v1053
      %v1120 = vadd.f32 %v945, %v1104
      %v1121 = vadd.f32 %v946, %v1055
      %v1122 = vadd.f32 %v947, %v1057
      %v1123 = vadd.f32 %v948, %v1107
      %v1124 = vadd.f32 %v949, %v1061
      %v1125 = vadd.f32 %v950, %v1063
      %v1126 = vadd.f32 %v951, %v1112
      %v1127 = vadd.f32 %v952, %v1065
      %v1128 = vadd.f32 %v953, %v1067
      %v1129 = vadd.f32 %v954, %v1115
      %s1130 = scalar_lea.vmem %s0, 80
      %v1131 = vld [vmem:[%s1130] sm:$0xf]
      %v1132 = vld [vmem:[%s1130 + $0x4] sm:$0xf]
      %v1133 = vld [vmem:[%s1130 + $0x8] sm:$0xf]
      %v1134 = vld [vmem:[%s1130 + $0xc] sm:$0xf]
      %v1139 = vunpack.c.l.b16 %v1131
      %v1140 = vunpack.c.l.b16 %v1132
      %v1141 = vunpack.c.l.b16 %v1133
      %v1142 = vunpack.c.l.b16 %v1134
      %v1143 = vpack.c.b16 %v1140, %v1139
      %v1144 = vpack.c.b16 %v1142, %v1141
      %1145 = vrot.lane.b32.xlu0 %v313, 108
      %v1146 = vpop.permute.xlu0 %1145
      %1147 = vrot.lane.b32.xlu0 %v314, 108
      %v1148 = vpop.permute.xlu0 %1147
      %1149 = vrot.lane.b32.xlu0 %v315, 108
      %v1150 = vpop.permute.xlu0 %1149
      %1151 = vrot.lane.b32.xlu0 %v316, 108
      %v1152 = vpop.permute.xlu0 %1151
      %1153 = vrot.lane.b32.xlu0 %v317, 108
      %v1154 = vpop.permute.xlu0 %1153
      %1155 = vrot.lane.b32.xlu0 %v318, 108
      %v1156 = vpop.permute.xlu0 %1155
      %1157 = vrot.lane.b32.xlu0 %v319, 108
      %v1158 = vpop.permute.xlu0 %1157
      %1159 = vrot.lane.b32.xlu0 %v320, 108
      %v1160 = vpop.permute.xlu0 %1159
      %1161 = vrot.lane.b32.xlu0 %v321, 108
      %v1162 = vpop.permute.xlu0 %1161
      %vm1163 = vcmask 883712
      %v1164 = vsel %vm1163, %v1146, %v1148
      %v1165 = vsel %vm1163, %v1148, %v1150
      %v1166 = vsel %vm1163, %v1152, %v1154
      %v1167 = vsel %vm1163, %v1154, %v1156
      %v1168 = vsel %vm1163, %v1158, %v1160
      %v1169 = vsel %vm1163, %v1160, %v1162
      %v1177 = vsel %vm353, %v1143, 0
      %v1180 = vsel %vm353, %v1144, 0
      %v1183 = vsel %vm360, %v1168, 0
      %v1186 = vsel %vm360, %v1169, 0
      %v1189 = vsel %vm360, %v1162, 0
      %1191 = vmatprep.subr.bf16.mxu0 %v1165
      %1192 = vmatpush1.bf16.msra.mxu0 %v1164
      %1193 = vmatprep.subr.bf16.mxu0 %v1167
      %1194 = vmatpush1.bf16.msra.mxu0 %v1166
      %1195 = vmatprep.subr.bf16.mxu0 %v1186
      %1196 = vmatpush1.bf16.msra.mxu0 %v1183
      %1197 = vmatprep.subr.bf16.mxu0 0
      %1198 = vmatpush1.bf16.msra.mxu0 0
      %1199 = vmatprep.subr.bf16.mxu0 0
      %1200 = vmatpush1.bf16.msra.mxu0 0
      %1201 = vmatprep.subr.bf16.mxu0 0
      %1202 = vmatpush1.bf16.msra.mxu0 0
      %1203 = vmatprep.subr.bf16.mxu0 0
      %1204 = vmatpush1.bf16.msra.mxu0 0
      %1205 = vmatprep.subr.bf16.mxu0 0
      %1206 = vmatpush1.bf16.msra.mxu0 0
      %1207 = vmatprep.subr.bf16.mxu0 0
      %1208 = vmatpush1.bf16.msra.mxu0 0
      %1209 = vmatprep.subr.bf16.mxu0 0
      %1210 = vmatpush1.bf16.msra.mxu0 0
      %1211 = vmatprep.subr.bf16.mxu0 0
      %1212 = vmatpush1.bf16.msra.mxu0 0
      %1213 = vmatprep.subr.bf16.mxu0 0
      %1214 = vmatpush1.bf16.msra.mxu0 0
      %1215 = vmatprep.subr.bf16.mxu0 0
      %1216 = vmatpush1.bf16.msra.mxu0 0
      %1217 = vmatprep.subr.bf16.mxu0 0
      %1218 = vmatpush1.bf16.msra.mxu0 0
      %1219 = vmatprep.subr.bf16.mxu0 0
      %1220 = vmatpush1.bf16.msra.mxu0 0
      %1221 = vmatprep.subr.bf16.mxu0 0
      %1222 = vmatpush1.bf16.msra.mxu0 0
      %1223 = vmatprep.mubr.bf16.mxu0 0
      %1224 = vmatmul.mubr.bf16.gmra.mrb[0].mxu0 %v1177
      %v1225 = vpop.f32.mrb[0].mxu0
      %v1226 = vadd.f32 0.0, %v1225
      %v1227 = vpop.f32.mrb[0].mxu0
      %v1228 = vadd.f32 0.0, %v1227
      %v1229 = vpop.f32.mrb[0].mxu0
      %v1230 = vadd.f32 0.0, %v1229
      %v1231 = vpop.f32.mrb[0].mxu0
      %v1232 = vadd.f32 0.0, %v1231
      %1233 = vmatprep.mubr.bf16.mxu0 0
      %1234 = vmatmul.mubr.bf16.gmra.mrb[0].mxu0 %v1180
      %v1235 = vpop.f32.mrb[0].mxu0
      %v1236 = vadd.f32 0.0, %v1235
      %v1237 = vpop.f32.mrb[0].mxu0
      %v1238 = vadd.f32 0.0, %v1237
      %v1239 = vpop.f32.mrb[0].mxu0
      %v1240 = vadd.f32 0.0, %v1239
      %v1241 = vpop.f32.mrb[0].mxu0
      %v1242 = vadd.f32 0.0, %v1241
      %1243 = vdwg.mxu0
      %1244 = vmatprep.subr.bf16.mxu0 0
      %1245 = vmatpush1.bf16.msra.mxu0 %v1150
      %1246 = vmatprep.subr.bf16.mxu0 0
      %1247 = vmatpush1.bf16.msra.mxu0 %v1156
      %1248 = vmatprep.subr.bf16.mxu0 0
      %1249 = vmatpush1.bf16.msra.mxu0 %v1189
      %1250 = vmatprep.subr.bf16.mxu0 0
      %1251 = vmatpush1.bf16.msra.mxu0 0
      %1252 = vmatprep.subr.bf16.mxu0 0
      %1253 = vmatpush1.bf16.msra.mxu0 0
      %1254 = vmatprep.subr.bf16.mxu0 0
      %1255 = vmatpush1.bf16.msra.mxu0 0
      %1256 = vmatprep.subr.bf16.mxu0 0
      %1257 = vmatpush1.bf16.msra.mxu0 0
      %1258 = vmatprep.subr.bf16.mxu0 0
      %1259 = vmatpush1.bf16.msra.mxu0 0
      %1260 = vmatprep.subr.bf16.mxu0 0
      %1261 = vmatpush1.bf16.msra.mxu0 0
      %1262 = vmatprep.subr.bf16.mxu0 0
      %1263 = vmatpush1.bf16.msra.mxu0 0
      %1264 = vmatprep.subr.bf16.mxu0 0
      %1265 = vmatpush1.bf16.msra.mxu0 0
      %1266 = vmatprep.subr.bf16.mxu0 0
      %1267 = vmatpush1.bf16.msra.mxu0 0
      %1268 = vmatprep.subr.bf16.mxu0 0
      %1269 = vmatpush1.bf16.msra.mxu0 0
      %1270 = vmatprep.subr.bf16.mxu0 0
      %1271 = vmatpush1.bf16.msra.mxu0 0
      %1272 = vmatprep.subr.bf16.mxu0 0
      %1273 = vmatpush1.bf16.msra.mxu0 0
      %1274 = vmatprep.subr.bf16.mxu0 0
      %1275 = vmatpush1.bf16.msra.mxu0 0
      %1276 = vmatprep.mubr.bf16.mxu0 0
      %1277 = vmatmul.mubr.bf16.gmra.mrb[0].mxu0 %v1177
      %v1278 = vpop.f32.mrb[0].mxu0
      %v1279 = vadd.f32 0.0, %v1278
      %v1280 = vpop.f32.mrb[0].mxu0
      %v1281 = vpop.f32.mrb[0].mxu0
      %v1282 = vadd.f32 0.0, %v1281
      %v1283 = vpop.f32.mrb[0].mxu0
      %1284 = vmatprep.mubr.bf16.mxu0 0
      %1285 = vmatmul.mubr.bf16.gmra.mrb[0].mxu0 %v1180
      %v1286 = vpop.f32.mrb[0].mxu0
      %v1287 = vadd.f32 0.0, %v1286
      %v1288 = vpop.f32.mrb[0].mxu0
      %v1289 = vpop.f32.mrb[0].mxu0
      %v1290 = vadd.f32 0.0, %v1289
      %v1291 = vpop.f32.mrb[0].mxu0
      %1292 = vdwg.mxu0
      %v1293 = vadd.f32 %v1118, %v1226
      %v1294 = vadd.f32 %v1119, %v1228
      %v1295 = vadd.f32 %v1120, %v1279
      %v1296 = vadd.f32 %v1121, %v1230
      %v1297 = vadd.f32 %v1122, %v1232
      %v1298 = vadd.f32 %v1123, %v1282
      %v1299 = vadd.f32 %v1124, %v1236
      %v1300 = vadd.f32 %v1125, %v1238
      %v1301 = vadd.f32 %v1126, %v1287
      %v1302 = vadd.f32 %v1127, %v1240
      %v1303 = vadd.f32 %v1128, %v1242
      %v1304 = vadd.f32 %v1129, %v1290
      %s1305 = scalar_lea.vmem %s0, 96
      %v1306 = vld [vmem:[%s1305] sm:$0xf]
      %v1307 = vld [vmem:[%s1305 + $0x4] sm:$0xf]
      %v1308 = vld [vmem:[%s1305 + $0x8] sm:$0xf]
      %v1309 = vld [vmem:[%s1305 + $0xc] sm:$0xf]
      %v1314 = vunpack.c.l.b16 %v1306
      %v1315 = vunpack.c.l.b16 %v1307
      %v1316 = vunpack.c.l.b16 %v1308
      %v1317 = vunpack.c.l.b16 %v1309
      %v1318 = vpack.c.b16 %v1315, %v1314
      %v1319 = vpack.c.b16 %v1317, %v1316
      %1320 = vrot.lane.b32.xlu0 %v313, 92
      %v1321 = vpop.permute.xlu0 %1320
      %1322 = vrot.lane.b32.xlu0 %v314, 92
      %v1323 = vpop.permute.xlu0 %1322
      %1324 = vrot.lane.b32.xlu0 %v315, 92
      %v1325 = vpop.permute.xlu0 %1324
      %1326 = vrot.lane.b32.xlu0 %v316, 92
      %v1327 = vpop.permute.xlu0 %1326
      %1328 = vrot.lane.b32.xlu0 %v317, 92
      %v1329 = vpop.permute.xlu0 %1328
      %1330 = vrot.lane.b32.xlu0 %v318, 92
      %v1331 = vpop.permute.xlu0 %1330
      %1332 = vrot.lane.b32.xlu0 %v319, 92
      %v1333 = vpop.permute.xlu0 %1332
      %1334 = vrot.lane.b32.xlu0 %v320, 92
      %v1335 = vpop.permute.xlu0 %1334
      %1336 = vrot.lane.b32.xlu0 %v321, 92
      %v1337 = vpop.permute.xlu0 %1336
      %vm1338 = vcmask 752640
      %v1339 = vsel %vm1338, %v1321, %v1323
      %v1340 = vsel %vm1338, %v1323, %v1325
      %v1341 = vsel %vm1338, %v1327, %v1329
      %v1342 = vsel %vm1338, %v1329, %v1331
      %v1343 = vsel %vm1338, %v1333, %v1335
      %v1344 = vsel %vm1338, %v1335, %v1337
      %v1352 = vsel %vm353, %v1318, 0
      %v1355 = vsel %vm353, %v1319, 0
      %v1358 = vsel %vm360, %v1343, 0
      %v1361 = vsel %vm360, %v1344, 0
      %v1364 = vsel %vm360, %v1337, 0
      %1366 = vmatprep.subr.bf16.mxu0 %v1340
      %1367 = vmatpush1.bf16.msra.mxu0 %v1339
      %1368 = vmatprep.subr.bf16.mxu0 %v1342
      %1369 = vmatpush1.bf16.msra.mxu0 %v1341
      %1370 = vmatprep.subr.bf16.mxu0 %v1361
      %1371 = vmatpush1.bf16.msra.mxu0 %v1358
      %1372 = vmatprep.subr.bf16.mxu0 0
      %1373 = vmatpush1.bf16.msra.mxu0 0
      %1374 = vmatprep.subr.bf16.mxu0 0
      %1375 = vmatpush1.bf16.msra.mxu0 0
      %1376 = vmatprep.subr.bf16.mxu0 0
      %1377 = vmatpush1.bf16.msra.mxu0 0
      %1378 = vmatprep.subr.bf16.mxu0 0
      %1379 = vmatpush1.bf16.msra.mxu0 0
      %1380 = vmatprep.subr.bf16.mxu0 0
      %1381 = vmatpush1.bf16.msra.mxu0 0
      %1382 = vmatprep.subr.bf16.mxu0 0
      %1383 = vmatpush1.bf16.msra.mxu0 0
      %1384 = vmatprep.subr.bf16.mxu0 0
      %1385 = vmatpush1.bf16.msra.mxu0 0
      %1386 = vmatprep.subr.bf16.mxu0 0
      %1387 = vmatpush1.bf16.msra.mxu0 0
      %1388 = vmatprep.subr.bf16.mxu0 0
      %1389 = vmatpush1.bf16.msra.mxu0 0
      %1390 = vmatprep.subr.bf16.mxu0 0
      %1391 = vmatpush1.bf16.msra.mxu0 0
      %1392 = vmatprep.subr.bf16.mxu0 0
      %1393 = vmatpush1.bf16.msra.mxu0 0
      %1394 = vmatprep.subr.bf16.mxu0 0
      %1395 = vmatpush1.bf16.msra.mxu0 0
      %1396 = vmatprep.subr.bf16.mxu0 0
      %1397 = vmatpush1.bf16.msra.mxu0 0
      %1398 = vmatprep.mubr.bf16.mxu0 0
      %1399 = vmatmul.mubr.bf16.gmra.mrb[0].mxu0 %v1352
      %v1400 = vpop.f32.mrb[0].mxu0
      %v1401 = vadd.f32 0.0, %v1400
      %v1402 = vpop.f32.mrb[0].mxu0
      %v1403 = vadd.f32 0.0, %v1402
      %v1404 = vpop.f32.mrb[0].mxu0
      %v1405 = vadd.f32 0.0, %v1404
      %v1406 = vpop.f32.mrb[0].mxu0
      %v1407 = vadd.f32 0.0, %v1406
      %1408 = vmatprep.mubr.bf16.mxu0 0
      %1409 = vmatmul.mubr.bf16.gmra.mrb[0].mxu0 %v1355
      %v1410 = vpop.f32.mrb[0].mxu0
      %v1411 = vadd.f32 0.0, %v1410
      %v1412 = vpop.f32.mrb[0].mxu0
      %v1413 = vadd.f32 0.0, %v1412
      %v1414 = vpop.f32.mrb[0].mxu0
      %v1415 = vadd.f32 0.0, %v1414
      %v1416 = vpop.f32.mrb[0].mxu0
      %v1417 = vadd.f32 0.0, %v1416
      %1418 = vdwg.mxu0
      %1419 = vmatprep.subr.bf16.mxu0 0
      %1420 = vmatpush1.bf16.msra.mxu0 %v1325
      %1421 = vmatprep.subr.bf16.mxu0 0
      %1422 = vmatpush1.bf16.msra.mxu0 %v1331
      %1423 = vmatprep.subr.bf16.mxu0 0
      %1424 = vmatpush1.bf16.msra.mxu0 %v1364
      %1425 = vmatprep.subr.bf16.mxu0 0
      %1426 = vmatpush1.bf16.msra.mxu0 0
      %1427 = vmatprep.subr.bf16.mxu0 0
      %1428 = vmatpush1.bf16.msra.mxu0 0
      %1429 = vmatprep.subr.bf16.mxu0 0
      %1430 = vmatpush1.bf16.msra.mxu0 0
      %1431 = vmatprep.subr.bf16.mxu0 0
      %1432 = vmatpush1.bf16.msra.mxu0 0
      %1433 = vmatprep.subr.bf16.mxu0 0
      %1434 = vmatpush1.bf16.msra.mxu0 0
      %1435 = vmatprep.subr.bf16.mxu0 0
      %1436 = vmatpush1.bf16.msra.mxu0 0
      %1437 = vmatprep.subr.bf16.mxu0 0
      %1438 = vmatpush1.bf16.msra.mxu0 0
      %1439 = vmatprep.subr.bf16.mxu0 0
      %1440 = vmatpush1.bf16.msra.mxu0 0
      %1441 = vmatprep.subr.bf16.mxu0 0
      %1442 = vmatpush1.bf16.msra.mxu0 0
      %1443 = vmatprep.subr.bf16.mxu0 0
      %1444 = vmatpush1.bf16.msra.mxu0 0
      %1445 = vmatprep.subr.bf16.mxu0 0
      %1446 = vmatpush1.bf16.msra.mxu0 0
      %1447 = vmatprep.subr.bf16.mxu0 0
      %1448 = vmatpush1.bf16.msra.mxu0 0
      %1449 = vmatprep.subr.bf16.mxu0 0
      %1450 = vmatpush1.bf16.msra.mxu0 0
      %1451 = vmatprep.mubr.bf16.mxu0 0
      %1452 = vmatmul.mubr.bf16.gmra.mrb[0].mxu0 %v1352
      %v1453 = vpop.f32.mrb[0].mxu0
      %v1454 = vadd.f32 0.0, %v1453
      %v1455 = vpop.f32.mrb[0].mxu0
      %v1456 = vpop.f32.mrb[0].mxu0
      %v1457 = vadd.f32 0.0, %v1456
      %v1458 = vpop.f32.mrb[0].mxu0
      %1459 = vmatprep.mubr.bf16.mxu0 0
      %1460 = vmatmul.mubr.bf16.gmra.mrb[0].mxu0 %v1355
      %v1461 = vpop.f32.mrb[0].mxu0
      %v1462 = vadd.f32 0.0, %v1461
      %v1463 = vpop.f32.mrb[0].mxu0
      %v1464 = vpop.f32.mrb[0].mxu0
      %v1465 = vadd.f32 0.0, %v1464
      %v1466 = vpop.f32.mrb[0].mxu0
      %1467 = vdwg.mxu0
      %v1468 = vadd.f32 %v1293, %v1401
      %v1469 = vadd.f32 %v1294, %v1403
      %v1470 = vadd.f32 %v1295, %v1454
      %v1471 = vadd.f32 %v1296, %v1405
      %v1472 = vadd.f32 %v1297, %v1407
      %v1473 = vadd.f32 %v1298, %v1457
      %v1474 = vadd.f32 %v1299, %v1411
      %v1475 = vadd.f32 %v1300, %v1413
      %v1476 = vadd.f32 %v1301, %v1462
      %v1477 = vadd.f32 %v1302, %v1415
      %v1478 = vadd.f32 %v1303, %v1417
      %v1479 = vadd.f32 %v1304, %v1465
      %s1480 = scalar_lea.vmem %s0, 112
      %v1481 = vld [vmem:[%s1480] sm:$0xf]
      %v1482 = vld [vmem:[%s1480 + $0x4] sm:$0xf]
      %v1483 = vld [vmem:[%s1480 + $0x8] sm:$0xf]
      %v1484 = vld [vmem:[%s1480 + $0xc] sm:$0xf]
      %v1489 = vunpack.c.l.b16 %v1481
      %v1490 = vunpack.c.l.b16 %v1482
      %v1491 = vunpack.c.l.b16 %v1483
      %v1492 = vunpack.c.l.b16 %v1484
      %v1493 = vpack.c.b16 %v1490, %v1489
      %v1494 = vpack.c.b16 %v1492, %v1491
      %1495 = vrot.lane.b32.xlu0 %v313, 91
      %v1496 = vpop.permute.xlu0 %1495
      %1497 = vrot.lane.b32.xlu0 %v314, 91
      %v1498 = vpop.permute.xlu0 %1497
      %1499 = vrot.lane.b32.xlu0 %v315, 91
      %v1500 = vpop.permute.xlu0 %1499
      %1501 = vrot.lane.b32.xlu0 %v316, 91
      %v1502 = vpop.permute.xlu0 %1501
      %1503 = vrot.lane.b32.xlu0 %v317, 91
      %v1504 = vpop.permute.xlu0 %1503
      %1505 = vrot.lane.b32.xlu0 %v318, 91
      %v1506 = vpop.permute.xlu0 %1505
      %1507 = vrot.lane.b32.xlu0 %v319, 91
      %v1508 = vpop.permute.xlu0 %1507
      %1509 = vrot.lane.b32.xlu0 %v320, 91
      %v1510 = vpop.permute.xlu0 %1509
      %1511 = vrot.lane.b32.xlu0 %v321, 91
      %v1512 = vpop.permute.xlu0 %1511
      %vm1513 = vcmask 744448
      %v1514 = vsel %vm1513, %v1496, %v1498
      %v1515 = vsel %vm1513, %v1498, %v1500
      %v1516 = vsel %vm1513, %v1502, %v1504
      %v1517 = vsel %vm1513, %v1504, %v1506
      %v1518 = vsel %vm1513, %v1508, %v1510
      %v1519 = vsel %vm1513, %v1510, %v1512
      %v1527 = vsel %vm353, %v1493, 0
      %v1530 = vsel %vm353, %v1494, 0
      %v1533 = vsel %vm360, %v1518, 0
      %v1536 = vsel %vm360, %v1519, 0
      %v1539 = vsel %vm360, %v1512, 0
      %1541 = vmatprep.subr.bf16.mxu0 %v1515
      %1542 = vmatpush1.bf16.msra.mxu0 %v1514
      %1543 = vmatprep.subr.bf16.mxu0 %v1517
      %1544 = vmatpush1.bf16.msra.mxu0 %v1516
      %1545 = vmatprep.subr.bf16.mxu0 %v1536
      %1546 = vmatpush1.bf16.msra.mxu0 %v1533
      %1547 = vmatprep.subr.bf16.mxu0 0
      %1548 = vmatpush1.bf16.msra.mxu0 0
      %1549 = vmatprep.subr.bf16.mxu0 0
      %1550 = vmatpush1.bf16.msra.mxu0 0
      %1551 = vmatprep.subr.bf16.mxu0 0
      %1552 = vmatpush1.bf16.msra.mxu0 0
      %1553 = vmatprep.subr.bf16.mxu0 0
      %1554 = vmatpush1.bf16.msra.mxu0 0
      %1555 = vmatprep.subr.bf16.mxu0 0
      %1556 = vmatpush1.bf16.msra.mxu0 0
      %1557 = vmatprep.subr.bf16.mxu0 0
      %1558 = vmatpush1.bf16.msra.mxu0 0
      %1559 = vmatprep.subr.bf16.mxu0 0
      %1560 = vmatpush1.bf16.msra.mxu0 0
      %1561 = vmatprep.subr.bf16.mxu0 0
      %1562 = vmatpush1.bf16.msra.mxu0 0
      %1563 = vmatprep.subr.bf16.mxu0 0
      %1564 = vmatpush1.bf16.msra.mxu0 0
      %1565 = vmatprep.subr.bf16.mxu0 0
      %1566 = vmatpush1.bf16.msra.mxu0 0
      %1567 = vmatprep.subr.bf16.mxu0 0
      %1568 = vmatpush1.bf16.msra.mxu0 0
      %1569 = vmatprep.subr.bf16.mxu0 0
      %1570 = vmatpush1.bf16.msra.mxu0 0
      %1571 = vmatprep.subr.bf16.mxu0 0
      %1572 = vmatpush1.bf16.msra.mxu0 0
      %1573 = vmatprep.mubr.bf16.mxu0 0
      %1574 = vmatmul.mubr.bf16.gmra.mrb[0].mxu0 %v1527
      %v1575 = vpop.f32.mrb[0].mxu0
      %v1576 = vadd.f32 0.0, %v1575
      %v1577 = vpop.f32.mrb[0].mxu0
      %v1578 = vadd.f32 0.0, %v1577
      %v1579 = vpop.f32.mrb[0].mxu0
      %v1580 = vadd.f32 0.0, %v1579
      %v1581 = vpop.f32.mrb[0].mxu0
      %v1582 = vadd.f32 0.0, %v1581
      %1583 = vmatprep.mubr.bf16.mxu0 0
      %1584 = vmatmul.mubr.bf16.gmra.mrb[0].mxu0 %v1530
      %v1585 = vpop.f32.mrb[0].mxu0
      %v1586 = vadd.f32 0.0, %v1585
      %v1587 = vpop.f32.mrb[0].mxu0
      %v1588 = vadd.f32 0.0, %v1587
      %v1589 = vpop.f32.mrb[0].mxu0
      %v1590 = vadd.f32 0.0, %v1589
      %v1591 = vpop.f32.mrb[0].mxu0
      %v1592 = vadd.f32 0.0, %v1591
      %1593 = vdwg.mxu0
      %1594 = vmatprep.subr.bf16.mxu0 0
      %1595 = vmatpush1.bf16.msra.mxu0 %v1500
      %1596 = vmatprep.subr.bf16.mxu0 0
      %1597 = vmatpush1.bf16.msra.mxu0 %v1506
      %1598 = vmatprep.subr.bf16.mxu0 0
      %1599 = vmatpush1.bf16.msra.mxu0 %v1539
      %1600 = vmatprep.subr.bf16.mxu0 0
      %1601 = vmatpush1.bf16.msra.mxu0 0
      %1602 = vmatprep.subr.bf16.mxu0 0
      %1603 = vmatpush1.bf16.msra.mxu0 0
      %1604 = vmatprep.subr.bf16.mxu0 0
      %1605 = vmatpush1.bf16.msra.mxu0 0
      %1606 = vmatprep.subr.bf16.mxu0 0
      %1607 = vmatpush1.bf16.msra.mxu0 0
      %1608 = vmatprep.subr.bf16.mxu0 0
      %1609 = vmatpush1.bf16.msra.mxu0 0
      %1610 = vmatprep.subr.bf16.mxu0 0
      %1611 = vmatpush1.bf16.msra.mxu0 0
      %1612 = vmatprep.subr.bf16.mxu0 0
      %1613 = vmatpush1.bf16.msra.mxu0 0
      %1614 = vmatprep.subr.bf16.mxu0 0
      %1615 = vmatpush1.bf16.msra.mxu0 0
      %1616 = vmatprep.subr.bf16.mxu0 0
      %1617 = vmatpush1.bf16.msra.mxu0 0
      %1618 = vmatprep.subr.bf16.mxu0 0
      %1619 = vmatpush1.bf16.msra.mxu0 0
      %1620 = vmatprep.subr.bf16.mxu0 0
      %1621 = vmatpush1.bf16.msra.mxu0 0
      %1622 = vmatprep.subr.bf16.mxu0 0
      %1623 = vmatpush1.bf16.msra.mxu0 0
      %1624 = vmatprep.subr.bf16.mxu0 0
      %1625 = vmatpush1.bf16.msra.mxu0 0
      %1626 = vmatprep.mubr.bf16.mxu0 0
      %1627 = vmatmul.mubr.bf16.gmra.mrb[0].mxu0 %v1527
      %v1628 = vpop.f32.mrb[0].mxu0
      %v1629 = vadd.f32 0.0, %v1628
      %v1630 = vpop.f32.mrb[0].mxu0
      %v1631 = vpop.f32.mrb[0].mxu0
      %v1632 = vadd.f32 0.0, %v1631
      %v1633 = vpop.f32.mrb[0].mxu0
      %1634 = vmatprep.mubr.bf16.mxu0 0
      %1635 = vmatmul.mubr.bf16.gmra.mrb[0].mxu0 %v1530
      %v1636 = vpop.f32.mrb[0].mxu0
      %v1637 = vadd.f32 0.0, %v1636
      %v1638 = vpop.f32.mrb[0].mxu0
      %v1639 = vpop.f32.mrb[0].mxu0
      %v1640 = vadd.f32 0.0, %v1639
      %v1641 = vpop.f32.mrb[0].mxu0
      %1642 = vdwg.mxu0
      %v1643 = vadd.f32 %v1468, %v1576
      %v1644 = vadd.f32 %v1469, %v1578
      %v1645 = vadd.f32 %v1470, %v1629
      %v1646 = vadd.f32 %v1471, %v1580
      %v1647 = vadd.f32 %v1472, %v1582
      %v1648 = vadd.f32 %v1473, %v1632
      %v1649 = vadd.f32 %v1474, %v1586
      %v1650 = vadd.f32 %v1475, %v1588
      %v1651 = vadd.f32 %v1476, %v1637
      %v1652 = vadd.f32 %v1477, %v1590
      %v1653 = vadd.f32 %v1478, %v1592
      %v1654 = vadd.f32 %v1479, %v1640
      %s1655 = scalar_lea.vmem %s0, 128
      %v1656 = vld [vmem:[%s1655] sm:$0xf]
      %v1657 = vld [vmem:[%s1655 + $0x4] sm:$0xf]
      %v1658 = vld [vmem:[%s1655 + $0x8] sm:$0xf]
      %v1659 = vld [vmem:[%s1655 + $0xc] sm:$0xf]
      %v1664 = vunpack.c.l.b16 %v1656
      %v1665 = vunpack.c.l.b16 %v1657
      %v1666 = vunpack.c.l.b16 %v1658
      %v1667 = vunpack.c.l.b16 %v1659
      %v1668 = vpack.c.b16 %v1665, %v1664
      %v1669 = vpack.c.b16 %v1667, %v1666
      %1670 = vrot.lane.b32.xlu0 %v313, 90
      %v1671 = vpop.permute.xlu0 %1670
      %1672 = vrot.lane.b32.xlu0 %v314, 90
      %v1673 = vpop.permute.xlu0 %1672
      %1674 = vrot.lane.b32.xlu0 %v315, 90
      %v1675 = vpop.permute.xlu0 %1674
      %1676 = vrot.lane.b32.xlu0 %v316, 90
      %v1677 = vpop.permute.xlu0 %1676
      %1678 = vrot.lane.b32.xlu0 %v317, 90
      %v1679 = vpop.permute.xlu0 %1678
      %1680 = vrot.lane.b32.xlu0 %v318, 90
      %v1681 = vpop.permute.xlu0 %1680
      %1682 = vrot.lane.b32.xlu0 %v319, 90
      %v1683 = vpop.permute.xlu0 %1682
      %1684 = vrot.lane.b32.xlu0 %v320, 90
      %v1685 = vpop.permute.xlu0 %1684
      %1686 = vrot.lane.b32.xlu0 %v321, 90
      %v1687 = vpop.permute.xlu0 %1686
      %vm1688 = vcmask 736256
      %v1689 = vsel %vm1688, %v1671, %v1673
      %v1690 = vsel %vm1688, %v1673, %v1675
      %v1691 = vsel %vm1688, %v1677, %v1679
      %v1692 = vsel %vm1688, %v1679, %v1681
      %v1693 = vsel %vm1688, %v1683, %v1685
      %v1694 = vsel %vm1688, %v1685, %v1687
      %v1702 = vsel %vm353, %v1668, 0
      %v1705 = vsel %vm353, %v1669, 0
      %v1708 = vsel %vm360, %v1693, 0
      %v1711 = vsel %vm360, %v1694, 0
      %v1714 = vsel %vm360, %v1687, 0
      %1716 = vmatprep.subr.bf16.mxu0 %v1690
      %1717 = vmatpush1.bf16.msra.mxu0 %v1689
      %1718 = vmatprep.subr.bf16.mxu0 %v1692
      %1719 = vmatpush1.bf16.msra.mxu0 %v1691
      %1720 = vmatprep.subr.bf16.mxu0 %v1711
      %1721 = vmatpush1.bf16.msra.mxu0 %v1708
      %1722 = vmatprep.subr.bf16.mxu0 0
      %1723 = vmatpush1.bf16.msra.mxu0 0
      %1724 = vmatprep.subr.bf16.mxu0 0
      %1725 = vmatpush1.bf16.msra.mxu0 0
      %1726 = vmatprep.subr.bf16.mxu0 0
      %1727 = vmatpush1.bf16.msra.mxu0 0
      %1728 = vmatprep.subr.bf16.mxu0 0
      %1729 = vmatpush1.bf16.msra.mxu0 0
      %1730 = vmatprep.subr.bf16.mxu0 0
      %1731 = vmatpush1.bf16.msra.mxu0 0
      %1732 = vmatprep.subr.bf16.mxu0 0
      %1733 = vmatpush1.bf16.msra.mxu0 0
      %1734 = vmatprep.subr.bf16.mxu0 0
      %1735 = vmatpush1.bf16.msra.mxu0 0
      %1736 = vmatprep.subr.bf16.mxu0 0
      %1737 = vmatpush1.bf16.msra.mxu0 0
      %1738 = vmatprep.subr.bf16.mxu0 0
      %1739 = vmatpush1.bf16.msra.mxu0 0
      %1740 = vmatprep.subr.bf16.mxu0 0
      %1741 = vmatpush1.bf16.msra.mxu0 0
      %1742 = vmatprep.subr.bf16.mxu0 0
      %1743 = vmatpush1.bf16.msra.mxu0 0
      %1744 = vmatprep.subr.bf16.mxu0 0
      %1745 = vmatpush1.bf16.msra.mxu0 0
      %1746 = vmatprep.subr.bf16.mxu0 0
      %1747 = vmatpush1.bf16.msra.mxu0 0
      %1748 = vmatprep.mubr.bf16.mxu0 0
      %1749 = vmatmul.mubr.bf16.gmra.mrb[0].mxu0 %v1702
      %v1750 = vpop.f32.mrb[0].mxu0
      %v1751 = vadd.f32 0.0, %v1750
      %v1752 = vpop.f32.mrb[0].mxu0
      %v1753 = vadd.f32 0.0, %v1752
      %v1754 = vpop.f32.mrb[0].mxu0
      %v1755 = vadd.f32 0.0, %v1754
      %v1756 = vpop.f32.mrb[0].mxu0
      %v1757 = vadd.f32 0.0, %v1756
      %1758 = vmatprep.mubr.bf16.mxu0 0
      %1759 = vmatmul.mubr.bf16.gmra.mrb[0].mxu0 %v1705
      %v1760 = vpop.f32.mrb[0].mxu0
      %v1761 = vadd.f32 0.0, %v1760
      %v1762 = vpop.f32.mrb[0].mxu0
      %v1763 = vadd.f32 0.0, %v1762
      %v1764 = vpop.f32.mrb[0].mxu0
      %v1765 = vadd.f32 0.0, %v1764
      %v1766 = vpop.f32.mrb[0].mxu0
      %v1767 = vadd.f32 0.0, %v1766
      %1768 = vdwg.mxu0
      %1769 = vmatprep.subr.bf16.mxu0 0
      %1770 = vmatpush1.bf16.msra.mxu0 %v1675
      %1771 = vmatprep.subr.bf16.mxu0 0
      %1772 = vmatpush1.bf16.msra.mxu0 %v1681
      %1773 = vmatprep.subr.bf16.mxu0 0
      %1774 = vmatpush1.bf16.msra.mxu0 %v1714
      %1775 = vmatprep.subr.bf16.mxu0 0
      %1776 = vmatpush1.bf16.msra.mxu0 0
      %1777 = vmatprep.subr.bf16.mxu0 0
      %1778 = vmatpush1.bf16.msra.mxu0 0
      %1779 = vmatprep.subr.bf16.mxu0 0
      %1780 = vmatpush1.bf16.msra.mxu0 0
      %1781 = vmatprep.subr.bf16.mxu0 0
      %1782 = vmatpush1.bf16.msra.mxu0 0
      %1783 = vmatprep.subr.bf16.mxu0 0
      %1784 = vmatpush1.bf16.msra.mxu0 0
      %1785 = vmatprep.subr.bf16.mxu0 0
      %1786 = vmatpush1.bf16.msra.mxu0 0
      %1787 = vmatprep.subr.bf16.mxu0 0
      %1788 = vmatpush1.bf16.msra.mxu0 0
      %1789 = vmatprep.subr.bf16.mxu0 0
      %1790 = vmatpush1.bf16.msra.mxu0 0
      %1791 = vmatprep.subr.bf16.mxu0 0
      %1792 = vmatpush1.bf16.msra.mxu0 0
      %1793 = vmatprep.subr.bf16.mxu0 0
      %1794 = vmatpush1.bf16.msra.mxu0 0
      %1795 = vmatprep.subr.bf16.mxu0 0
      %1796 = vmatpush1.bf16.msra.mxu0 0
      %1797 = vmatprep.subr.bf16.mxu0 0
      %1798 = vmatpush1.bf16.msra.mxu0 0
      %1799 = vmatprep.subr.bf16.mxu0 0
      %1800 = vmatpush1.bf16.msra.mxu0 0
      %1801 = vmatprep.mubr.bf16.mxu0 0
      %1802 = vmatmul.mubr.bf16.gmra.mrb[0].mxu0 %v1702
      %v1803 = vpop.f32.mrb[0].mxu0
      %v1804 = vadd.f32 0.0, %v1803
      %v1805 = vpop.f32.mrb[0].mxu0
      %v1806 = vpop.f32.mrb[0].mxu0
      %v1807 = vadd.f32 0.0, %v1806
      %v1808 = vpop.f32.mrb[0].mxu0
      %1809 = vmatprep.mubr.bf16.mxu0 0
      %1810 = vmatmul.mubr.bf16.gmra.mrb[0].mxu0 %v1705
      %v1811 = vpop.f32.mrb[0].mxu0
      %v1812 = vadd.f32 0.0, %v1811
      %v1813 = vpop.f32.mrb[0].mxu0
      %v1814 = vpop.f32.mrb[0].mxu0
      %v1815 = vadd.f32 0.0, %v1814
      %v1816 = vpop.f32.mrb[0].mxu0
      %1817 = vdwg.mxu0
      %v1818 = vadd.f32 %v1643, %v1751
      %v1819 = vadd.f32 %v1644, %v1753
      %v1820 = vadd.f32 %v1645, %v1804
      %v1821 = vadd.f32 %v1646, %v1755
      %v1822 = vadd.f32 %v1647, %v1757
      %v1823 = vadd.f32 %v1648, %v1807
      %v1824 = vadd.f32 %v1649, %v1761
      %v1825 = vadd.f32 %v1650, %v1763
      %v1826 = vadd.f32 %v1651, %v1812
      %v1827 = vadd.f32 %v1652, %v1765
      %v1828 = vadd.f32 %v1653, %v1767
      %v1829 = vadd.f32 %v1654, %v1815
      %v1830 = vld [vmem:[%s1] sm:$0xff]
      %v1831 = vld [vmem:[%s1 + $0x8] sm:$0xff]
      %v1832 = vld [vmem:[%s1 + $0x10] sm:$0xff]
      %v1833 = vld [vmem:[%s1 + $0x18] sm:$0xff]
      %1835 = vset.pattern.permute.xlu0 0
      %1836 = vperm.xlu0 %1835, %v1830
      %v1837 = vpop.permute.xlu0 %1836
      %1840 = vset.pattern.permute.xlu0 0
      %1841 = vperm.xlu0 %1840, %v1831
      %v1842 = vpop.permute.xlu0 %1841
      %1845 = vset.pattern.permute.xlu0 0
      %1846 = vperm.xlu0 %1845, %v1832
      %v1847 = vpop.permute.xlu0 %1846
      %1850 = vset.pattern.permute.xlu0 0
      %1851 = vperm.xlu0 %1850, %v1833
      %v1852 = vpop.permute.xlu0 %1851
      %v1854 = vadd.f32 %v1818, %v1837
      %v1855 = vadd.f32 %v1819, %v1837
      %v1856 = vadd.f32 %v1820, %v1837
      %v1857 = vadd.f32 %v1821, %v1842
      %v1858 = vadd.f32 %v1822, %v1842
      %v1859 = vadd.f32 %v1823, %v1842
      %v1860 = vadd.f32 %v1824, %v1847
      %v1861 = vadd.f32 %v1825, %v1847
      %v1862 = vadd.f32 %v1826, %v1847
      %v1863 = vadd.f32 %v1827, %v1852
      %v1864 = vadd.f32 %v1828, %v1852
      %v1865 = vadd.f32 %v1829, %v1852
      %v1866 = vxor.u32 %v1854, 2147483648
      %v1867 = vxor.u32 %v1855, 2147483648
      %v1868 = vxor.u32 %v1856, 2147483648
      %v1869 = vxor.u32 %v1857, 2147483648
      %v1870 = vxor.u32 %v1858, 2147483648
      %v1871 = vxor.u32 %v1859, 2147483648
      %v1872 = vxor.u32 %v1860, 2147483648
      %v1873 = vxor.u32 %v1861, 2147483648
      %v1874 = vxor.u32 %v1862, 2147483648
      %v1875 = vxor.u32 %v1863, 2147483648
      %v1876 = vxor.u32 %v1864, 2147483648
      %v1877 = vxor.u32 %v1865, 2147483648
      %v1878 = vmul.f32 %v1866, 1.442695
      %v1879 = vpow.pop %v1878
      %v1880 = vmul.f32 %v1867, 1.442695
      %v1881 = vpow.pop %v1880
      %v1882 = vmul.f32 %v1868, 1.442695
      %v1883 = vpow.pop %v1882
      %v1884 = vmul.f32 %v1869, 1.442695
      %v1885 = vpow.pop %v1884
      %v1886 = vmul.f32 %v1870, 1.442695
      %v1887 = vpow.pop %v1886
      %v1888 = vmul.f32 %v1871, 1.442695
      %v1889 = vpow.pop %v1888
      %v1890 = vmul.f32 %v1872, 1.442695
      %v1891 = vpow.pop %v1890
      %v1892 = vmul.f32 %v1873, 1.442695
      %v1893 = vpow.pop %v1892
      %v1894 = vmul.f32 %v1874, 1.442695
      %v1895 = vpow.pop %v1894
      %v1896 = vmul.f32 %v1875, 1.442695
      %v1897 = vpow.pop %v1896
      %v1898 = vmul.f32 %v1876, 1.442695
      %v1899 = vpow.pop %v1898
      %v1900 = vmul.f32 %v1877, 1.442695
      %v1901 = vpow.pop %v1900
      %v1902 = vadd.f32 %v1879, 1.0
      %v1903 = vadd.f32 %v1881, 1.0
      %v1904 = vadd.f32 %v1883, 1.0
      %v1905 = vadd.f32 %v1885, 1.0
      %v1906 = vadd.f32 %v1887, 1.0
      %v1907 = vadd.f32 %v1889, 1.0
      %v1908 = vadd.f32 %v1891, 1.0
      %v1909 = vadd.f32 %v1893, 1.0
      %v1910 = vadd.f32 %v1895, 1.0
      %v1911 = vadd.f32 %v1897, 1.0
      %v1912 = vadd.f32 %v1899, 1.0
      %v1913 = vadd.f32 %v1901, 1.0
      %v1914 = vrcp.pop %v1902
      %v1915 = vmul.f32 1.0, %v1914
      %v1916 = vrcp.pop %v1903
      %v1917 = vmul.f32 1.0, %v1916
      %v1918 = vrcp.pop %v1904
      %v1919 = vmul.f32 1.0, %v1918
      %v1920 = vrcp.pop %v1905
      %v1921 = vmul.f32 1.0, %v1920
      %v1922 = vrcp.pop %v1906
      %v1923 = vmul.f32 1.0, %v1922
      %v1924 = vrcp.pop %v1907
      %v1925 = vmul.f32 1.0, %v1924
      %v1926 = vrcp.pop %v1908
      %v1927 = vmul.f32 1.0, %v1926
      %v1928 = vrcp.pop %v1909
      %v1929 = vmul.f32 1.0, %v1928
      %v1930 = vrcp.pop %v1910
      %v1931 = vmul.f32 1.0, %v1930
      %v1932 = vrcp.pop %v1911
      %v1933 = vmul.f32 1.0, %v1932
      %v1934 = vrcp.pop %v1912
      %v1935 = vmul.f32 1.0, %v1934
      %v1936 = vrcp.pop %v1913
      %v1937 = vmul.f32 1.0, %v1936
      %v1938 = vtanh.pop %v1854
      %v1939 = vtanh.pop %v1855
      %v1940 = vtanh.pop %v1856
      %v1941 = vtanh.pop %v1857
      %v1942 = vtanh.pop %v1858
      %v1943 = vtanh.pop %v1859
      %v1944 = vtanh.pop %v1860
      %v1945 = vtanh.pop %v1861
      %v1946 = vtanh.pop %v1862
      %v1947 = vtanh.pop %v1863
      %v1948 = vtanh.pop %v1864
      %v1949 = vtanh.pop %v1865
      %v1950 = vld [vmem:[%s247] sm:$0xff]
      %v1951 = vld [vmem:[%s247 + $0x8] sm:$0xff]
      %v1952 = vld [vmem:[%s247 + $0x10] sm:$0xff]
      %v1953 = vld [vmem:[%s247 + $0x18] sm:$0xff]
      %v1954 = vld [vmem:[%s247 + $0x20] sm:$0xff]
      %v1955 = vld [vmem:[%s247 + $0x28] sm:$0xff]
      %v1956 = vld [vmem:[%s247 + $0x30] sm:$0xff]
      %v1957 = vld [vmem:[%s247 + $0x38] sm:$0xff]
      %v1958 = vld [vmem:[%s247 + $0x40] sm:$0xff]
      %v1959 = vld [vmem:[%s247 + $0x48] sm:$0xff]
      %v1960 = vld [vmem:[%s247 + $0x50] sm:$0xff]
      %v1961 = vld [vmem:[%s247 + $0x58] sm:$0xff]
      %v1962 = vadd.f32 %v1950, %v1938
      %v1963 = vadd.f32 %v1951, %v1939
      %v1964 = vadd.f32 %v1952, %v1940
      %v1965 = vadd.f32 %v1953, %v1941
      %v1966 = vadd.f32 %v1954, %v1942
      %v1967 = vadd.f32 %v1955, %v1943
      %v1968 = vadd.f32 %v1956, %v1944
      %v1969 = vadd.f32 %v1957, %v1945
      %v1970 = vadd.f32 %v1958, %v1946
      %v1971 = vadd.f32 %v1959, %v1947
      %v1972 = vadd.f32 %v1960, %v1948
      %v1973 = vadd.f32 %v1961, %v1949
      %v1974 = vmul.f32 %v1915, %v1962
      %v1975 = vmul.f32 %v1917, %v1963
      %v1976 = vmul.f32 %v1919, %v1964
      %v1977 = vmul.f32 %v1921, %v1965
      %v1978 = vmul.f32 %v1923, %v1966
      %v1979 = vmul.f32 %v1925, %v1967
      %v1980 = vmul.f32 %v1927, %v1968
      %v1981 = vmul.f32 %v1929, %v1969
      %v1982 = vmul.f32 %v1931, %v1970
      %v1983 = vmul.f32 %v1933, %v1971
      %v1984 = vmul.f32 %v1935, %v1972
      %v1985 = vmul.f32 %v1937, %v1973
      %v1986 = vtanh.pop %v1974
      %v1987 = vtanh.pop %v1975
      %v1988 = vtanh.pop %v1976
      %v1989 = vtanh.pop %v1977
      %v1990 = vtanh.pop %v1978
      %v1991 = vtanh.pop %v1979
      %v1992 = vtanh.pop %v1980
      %v1993 = vtanh.pop %v1981
      %v1994 = vtanh.pop %v1982
      %v1995 = vtanh.pop %v1983
      %v1996 = vtanh.pop %v1984
      %v1997 = vtanh.pop %v1985
      %v1998 = vmul.f32 %v1915, %v1986
      %v1999 = vmul.f32 %v1917, %v1987
      %v2000 = vmul.f32 %v1919, %v1988
      %v2001 = vmul.f32 %v1921, %v1989
      %v2002 = vmul.f32 %v1923, %v1990
      %v2003 = vmul.f32 %v1925, %v1991
      %v2004 = vmul.f32 %v1927, %v1992
      %v2005 = vmul.f32 %v1929, %v1993
      %v2006 = vmul.f32 %v1931, %v1994
      %v2007 = vmul.f32 %v1933, %v1995
      %v2008 = vmul.f32 %v1935, %v1996
      %v2009 = vmul.f32 %v1937, %v1997
      %v2010 = vpack.c.bf16 %v2001, %v1998
      %v2011 = vpack.c.bf16 %v2002, %v1999
      %v2012 = vpack.c.bf16 %v2003, %v2000
      %v2013 = vpack.c.bf16 %v2007, %v2004
      %v2014 = vpack.c.bf16 %v2008, %v2005
      %v2015 = vpack.c.bf16 %v2009, %v2006
      %v2022 = vunpack.c.l.b16 %v2010
      %v2023 = vunpack.c.l.b16 %v2011
      %v2024 = vunpack.c.l.b16 %v2012
      %v2025 = vunpack.c.h.b16 %v2010
      %v2026 = vunpack.c.h.b16 %v2011
      %v2027 = vunpack.c.h.b16 %v2012
      %v2028 = vunpack.c.l.b16 %v2013
      %v2029 = vunpack.c.l.b16 %v2014
      %v2030 = vunpack.c.l.b16 %v2015
      %v2031 = vunpack.c.h.b16 %v2013
      %v2032 = vunpack.c.h.b16 %v2014
      %v2033 = vunpack.c.h.b16 %v2015
      %v2034 = vpack.c.b16 %v2023, %v2022
      %v2035 = vpack.c.b16 %v2024, %v2024
      %v2036 = vpack.c.b16 %v2026, %v2025
      %v2037 = vpack.c.b16 %v2027, %v2027
      %v2038 = vpack.c.b16 %v2029, %v2028
      %v2039 = vpack.c.b16 %v2030, %v2030
      %v2040 = vpack.c.b16 %v2032, %v2031
      %v2041 = vpack.c.b16 %v2033, %v2033
      %2050 = vst [vmem:[%s252] sm:$0xff] %v2034
      %vm2051 = vcmask 551936
      %2052 = vst.msk [vmem:[%s252 + $0x8] sm:$0xf] %vm2051, %v2035
      %2053 = vst [vmem:[%s252 + $0xc] sm:$0xff] %v2036
      %2054 = vst.msk [vmem:[%s252 + $0x14] sm:$0xf] %vm2051, %v2037
      %2055 = vst [vmem:[%s252 + $0x18] sm:$0xff] %v2038
      %2056 = vst.msk [vmem:[%s252 + $0x20] sm:$0xf] %vm2051, %v2039
      %2057 = vst [vmem:[%s252 + $0x24] sm:$0xff] %v2040
      %2058 = vst.msk [vmem:[%s252 + $0x2c] sm:$0xf] %vm2051, %v2041
      %2059 = vst [vmem:[%s257] sm:$0xff] %v1974
      %2060 = vst [vmem:[%s257 + $0x8] sm:$0xff] %v1975
      %vm2061 = vcmask 556032
      %2062 = vst.msk [vmem:[%s257 + $0x10] sm:$0xff] %vm2061, %v1976
      %2063 = vst [vmem:[%s257 + $0x18] sm:$0xff] %v1977
      %2064 = vst [vmem:[%s257 + $0x20] sm:$0xff] %v1978
      %2065 = vst.msk [vmem:[%s257 + $0x28] sm:$0xff] %vm2061, %v1979
      %2066 = vst [vmem:[%s257 + $0x30] sm:$0xff] %v1980
      %2067 = vst [vmem:[%s257 + $0x38] sm:$0xff] %v1981
      %2068 = vst.msk [vmem:[%s257 + $0x40] sm:$0xff] %vm2061, %v1982
      %2069 = vst [vmem:[%s257 + $0x48] sm:$0xff] %v1983
      %2070 = vst [vmem:[%s257 + $0x50] sm:$0xff] %v1984
      %2071 = vst.msk [vmem:[%s257 + $0x58] sm:$0xff] %vm2061, %v1985
      %p2072 = scmp.lt.s32.totalorder %s17, 1
      %s2073 = scalar_select %p2072, %s17, 1
      %s2074 = smul.addr %s2073, 12
      %s2075 = smul.addr %s2074, 4
      %s2076 = scalar_lea.vmem %s4, %s2075
      %p2077 = scmp.lt.s32.totalorder %s17, 1
      %s2078 = scalar_select %p2077, %s17, 1
      %s2079 = smul.addr %s2078, 12
      %s2080 = smul.addr %s2079, 8
      %s2081 = scalar_lea.vmem %s5, %s2080
      // Predicated region
      $region37: #{lstm2d_forward.1} parent=35 // pred_check
        %p2082 = pneg %p129
      $region38: #{lstm2d_forward.1} parent=35 // pred_check_branch
        %2084 = sbr.rel (%p2082) target = $region40
      $region39: #{lstm2d_forward.1} parent=35 // pred_region
        _
      $region40: #{lstm2d_forward.1} parent=35 // pred_fallthru
        _
      // Predicated region
      $region41: #{lstm2d_forward.1} parent=35 // pred_check
        %p2085 = pneg %p155
      $region42: #{lstm2d_forward.1} parent=35 // pred_check_branch
        %2087 = sbr.rel (%p2085) target = $region44
      $region43: #{lstm2d_forward.1} parent=35 // pred_region
        _
      $region44: #{lstm2d_forward.1} parent=35 // pred_fallthru
        _
    $region36: #{lstm2d_forward.1} parent=5 // pred_fallthru
      _
    %p2088 = scmp.le.s32.totalorder 2, %s12
    // Predicated region
    $region45: #{lstm2d_forward.1} parent=5 // pred_check
      %p2089 = pneg %p2088
    $region46: #{lstm2d_forward.1} parent=5 // pred_check_branch
      %2091 = sbr.rel (%p2089) target = $region48
    $region47: #{lstm2d_forward.1} parent=5 // pred_region
      %s2092 = ssub.s32 %s12, 2
      // Predicated region
      $region49: #{lstm2d_forward.1} parent=47 // pred_check
        %p2093 = pneg %p135
      $region50: #{lstm2d_forward.1} parent=47 // pred_check_branch
        %2095 = sbr.rel (%p2093) target = $region52
      $region51: #{lstm2d_forward.1} parent=47 // pred_region
        %p2096 = scmp.lt.s32.totalorder %s18, 1
        %s2097 = scalar_select %p2096, %s18, 1
        %s2098 = smul.addr %s2097, 12
        %s2099 = smul.addr %s2098, 4
        %s2100 = scalar_lea.vmem %s4, %s2099
      $region52: #{lstm2d_forward.1} parent=47 // pred_fallthru
        _
      // Predicated region
      $region53: #{lstm2d_forward.1} parent=47 // pred_check
        %p2101 = pneg %p161
      $region54: #{lstm2d_forward.1} parent=47 // pred_check_branch
        %2103 = sbr.rel (%p2101) target = $region56
      $region55: #{lstm2d_forward.1} parent=47 // pred_region
        %p2104 = scmp.lt.s32.totalorder %s18, 1
        %s2105 = scalar_select %p2104, %s18, 1
        %s2106 = smul.addr %s2105, 12
        %s2107 = smul.addr %s2106, 8
        %s2108 = scalar_lea.vmem %s5, %s2107
      $region56: #{lstm2d_forward.1} parent=47 // pred_fallthru
        _
    $region48: #{lstm2d_forward.1} parent=5 // pred_fallthru
      _
  $region6: #{lstm2d_forward.1} parent=0 // loop_footer
    %s16 = sadd.s32 1, %s12
  $region7: #{lstm2d_forward.1} parent=0 // loop_footer_branch
    %11 = sbr.rel target = $region3
  $region8: #{lstm2d_forward.1} parent=0 // loop_exit
    _

</llo_original>
